<compile_context>
chip_gen: v7x
topology: tpu7x:2x2x1
jax: 0.10.0
libtpu: 0.0.40
codegen_flags: <defaults>
</compile_context>

<pallas_src>
import jax
import jax.numpy as jnp
from jax import lax
from jax.experimental import pallas as pl
from jax.experimental.pallas import tpu as pltpu


def _round_up(a: int, m: int) -> int:
    return (a + m - 1) // m * m


def _adapter_kernel(ids_ref, emb_ref, pos_ref, invf_ref, tok_ref, frq_ref, gbuf_ref):
    """One (batch b, packed-row tile j) step.

    ids_ref : (B, NT_pad) int32 token ids in SMEM (scalar prefetch).
    emb_ref : (V, C) token-embedding table, VMEM resident (grid-invariant block).
    pos_ref : (tile_p, k*C) packed positional-embedding tile for this j.
    invf_ref: (1, R) repeat-interleaved inverse frequencies.
    tok_ref : (tile_p, k*C) packed token+pos output tile.
    frq_ref : (tile_p*k, R) rotary frequency output tile.
    gbuf_ref: (8, k*C) VMEM scratch used to assemble one lane-dense granule.
    """
    b = pl.program_id(0)
    j = pl.program_id(1)
    tile_p, kc = tok_ref.shape
    c = emb_ref.shape[1]
    k_pack = kc // c                      # tokens packed per output row
    gran = gbuf_ref.shape[0]              # 8 packed rows per granule
    out_dt = tok_ref.dtype
    row_base = j * tile_p                 # first (global) packed row of this tile

    def granule(g, carry):
        r0 = pl.multiple_of(g * gran, gran)
        # Assemble `gran` lane-dense packed rows (k_pack tokens each) in scratch.
        # Static sub-range stores into the scratch are cheap VMEM-local writes.
        for rr in range(gran):
            g_row = row_base + r0 + rr
            for t in range(k_pack):
                tok = ids_ref[b, g_row * k_pack + t]              # SMEM scalar read
                gbuf_ref[pl.ds(rr, 1), pl.ds(t * c, c)] = (
                    emb_ref[pl.ds(tok, 1), :])                    # (1, C) row gather
        # One full-vreg add with the pre-packed positional embeddings and ONE
        # aligned, unmasked (gran, kc) store to the output tile.
        tok_ref[pl.ds(r0, gran), :] = (
            gbuf_ref[...].astype(out_dt)
            + pos_ref[pl.ds(r0, gran), :].astype(out_dt))
        return carry

    n_gran = tile_p // gran
    lax.fori_loop(0, n_gran, granule, 0, unroll=(n_gran <= 8))

    # Rotary frequency encoding for this tile's tokens: pos * inv_freq_repeated.
    # Emitted from the same kernel; rows align with the token tile.
    n_tok, r_dim = frq_ref.shape
    tok0 = j * n_tok
    pos_idx = (tok0 + lax.broadcasted_iota(jnp.int32, (n_tok, r_dim), 0)
               ).astype(jnp.float32)
    frq_ref[...] = pos_idx * invf_ref[...]


def token_input_adapter_with_rotary(x, txt_emb, pos_emb, inv_freq, *,
                                    packed_row_tile: int = 256):
    """x: (B, N) int token ids. Returns (tokens (B,N,C), freq (B,N,R) float32)."""
    B, N = x.shape
    V, C = txt_emb.shape
    max_seq_len = pos_emb.shape[0]
    if N > max_seq_len:
        raise ValueError(f"sequence length {N} exceeds max_seq_len {max_seq_len}")
    F = inv_freq.shape[0]
    R = 2 * F
    out_dtype = jnp.result_type(txt_emb.dtype, pos_emb.dtype)

    # ---- lane packing: k tokens per output row so the last dim is 128 lanes ----
    K = (128 // C) if (C < 128 and 128 % C == 0) else 1
    KC = K * C
    PN = -(-N // K)                              # packed rows needed
    PN8 = _round_up(max(PN, 8), 8)
    tile_p = max(8, min(_round_up(packed_row_tile, 8), PN8))
    if B == 1 and PN8 >= 16:                     # >=2 grid steps for v7x's 2 TCs
        tile_p = min(tile_p, _round_up(PN8 // 2, 8))
    PN_pad = _round_up(PN8, tile_p)
    NT = PN_pad * K                              # padded token count per batch row

    # Token ids (SMEM scalar prefetch). Clamp keeps in-kernel row reads in-bounds;
    # NOTE: nn.Embedding would raise on out-of-range ids — we clamp instead.
    ids = jnp.clip(x.astype(jnp.int32), 0, V - 1)
    ids_pad = jnp.zeros((B, NT), jnp.int32).at[:, :N].set(ids)

    # Positional embeddings for abs_pos = arange(N), packed to (PN_pad, K*C).
    pos_rows = jnp.zeros((NT, C), pos_emb.dtype).at[:N].set(pos_emb[:N])
    pos_packed = pos_rows.reshape(PN_pad, KC)

    # repeat_interleave(inv_freq, 2) -> (1, R)
    inv_freq_rep = jnp.repeat(inv_freq.astype(jnp.float32), 2).reshape(1, R)

    # ---- VMEM budget: generation-aware cap, generous estimate --------------------
    es_emb = jnp.dtype(txt_emb.dtype).itemsize
    es_pos = jnp.dtype(pos_emb.dtype).itemsize
    es_out = jnp.dtype(out_dtype).itemsize
    needed = (2 * V * C * es_emb                 # resident table (2x conservative)
              + 2 * tile_p * KC * es_pos         # pos tile (double-buffered)
              + 2 * R * 4                        # inv_freq
              + 2 * tile_p * KC * es_out         # token output tile
              + 2 * tile_p * K * R * 4           # freq output tile
              + 8 * KC * es_emb                  # granule scratch
              + (4 << 20))                       # headroom
    try:
        vmem_cap = int(pltpu.get_tpu_info().vmem_capacity_bytes)
    except Exception:
        vmem_cap = 128 << 20                     # v5e/v6e default; v7x is 64 MiB/TC
    vmem_limit = int(min(max(needed, 32 << 20), (vmem_cap * 9) // 10))

    grid_spec = pltpu.PrefetchScalarGridSpec(
        num_scalar_prefetch=1,
        grid=(B, PN_pad // tile_p),
        in_specs=[
            pl.BlockSpec((V, C), lambda b, j, ids_s: (0, 0)),          # whole table
            pl.BlockSpec((tile_p, KC), lambda b, j, ids_s: (j, 0)),    # pos tile
            pl.BlockSpec((1, R), lambda b, j, ids_s: (0, 0)),          # inv_freq
        ],
        out_specs=[
            pl.BlockSpec((None, tile_p, KC), lambda b, j, ids_s: (b, j, 0)),
            pl.BlockSpec((None, tile_p * K, R), lambda b, j, ids_s: (b, j, 0)),
        ],
        scratch_shapes=[pltpu.VMEM((8, KC), txt_emb.dtype)],
    )

    tok_packed, frq_pad = pl.pallas_call(
        _adapter_kernel,
        out_shape=(jax.ShapeDtypeStruct((B, PN_pad, KC), out_dtype),
                   jax.ShapeDtypeStruct((B, NT, R), jnp.float32)),
        grid_spec=grid_spec,
        compiler_params=pltpu.CompilerParams(
            dimension_semantics=("parallel", "parallel"),
            vmem_limit_bytes=vmem_limit,
        ),
    )(ids_pad, txt_emb, pos_packed, inv_freq_rep)

    tokens = tok_packed.reshape(B, NT, C)[:, :N, :]
    freq = frq_pad[:, :N, :]
    return tokens, freq


if __name__ == "__main__":
    # Module hyperparameters (small, consistent with the PyTorch __init__).
    rotated_channels_per_head = 16   # R
    vocab_size = 32                  # V
    max_seq_len = 16
    num_input_channels = 32          # C
    B, N = 2, 8

    key = jax.random.PRNGKey(0)
    k_tok, k_emb, k_pos = jax.random.split(key, 3)

    # Deterministic synthetic parameters (nn.Embedding weights ~ N(0, 1)).
    txt_emb = jax.random.normal(k_emb, (vocab_size, num_input_channels), jnp.float32)
    pos_emb = jax.random.normal(k_pos, (max_seq_len, num_input_channels), jnp.float32)
    inv_freq = 1.0 / (10000.0 ** (jnp.arange(0, rotated_channels_per_head, 2,
                                              dtype=jnp.float32)
                                  / rotated_channels_per_head))

    x = jax.random.randint(k_tok, (B, N), 0, vocab_size, dtype=jnp.int32)

    tok_out, frq_out = token_input_adapter_with_rotary(x, txt_emb, pos_emb, inv_freq)
    tok_out = jax.block_until_ready(tok_out)
    frq_out = jax.block_until_ready(frq_out)

    # Pure-JAX reference (mirrors the PyTorch forward with abs_pos=None).
    abs_pos = jnp.arange(N)
    ref_tok = txt_emb[x] + pos_emb[abs_pos][None, :, :]
    pe = abs_pos[:, None].astype(jnp.float32) * inv_freq[None, :]
    ref_frq = jnp.broadcast_to(jnp.repeat(pe, 2, axis=-1)[None],
                               (B, N, rotated_channels_per_head))

    assert tok_out.shape == (B, N, num_input_channels)
    assert frq_out.shape == (B, N, rotated_channels_per_head)
    assert jnp.allclose(tok_out, ref_tok, atol=1e-5, rtol=1e-5)
    assert jnp.allclose(frq_out, ref_frq, atol=1e-5, rtol=1e-5)

    print("KERNEL_OK")
</pallas_src>

<mosaic_0001>
module attributes {stable_mosaic.version = 11 : i64} {
  func.func @_adapter_kernel(%arg0: i32, %arg1: i32, %arg2: memref<2x32xi32, #tpu.memory_space<smem>>, %arg3: memref<32x32xf32, #tpu.memory_space<vmem>>, %arg4: memref<8x128xf32, #tpu.memory_space<vmem>>, %arg5: memref<1x16xf32, #tpu.memory_space<vmem>>, %arg6: memref<1x8x128xf32, #tpu.memory_space<vmem>>, %arg7: memref<1x32x16xf32, #tpu.memory_space<vmem>>, %arg8: memref<8x128xf32, #tpu.memory_space<vmem>>) attributes {dimension_semantics = [#tpu.dimension_semantics<parallel>, #tpu.dimension_semantics<parallel>], iteration_bounds = array<i64: 2, 1>, scalar_prefetch = 1 : i64, scratch_operands = 1 : i64, tpu.core_type = #tpu.core_type<tc>, window_params = [{pipeline_mode = #tpu.pipeline_mode<synchronous>, transform_indices = @transform_0, window_bounds = array<i64: 32, 32>}, {transform_indices = @transform_1, window_bounds = array<i64: 8, 128>}, {pipeline_mode = #tpu.pipeline_mode<synchronous>, transform_indices = @transform_2, window_bounds = array<i64: 1, 16>}, {transform_indices = @transform_3, window_bounds = array<i64: 1, 8, 128>}, {transform_indices = @transform_4, window_bounds = array<i64: 1, 32, 16>}]} {
    %c8_i32 = arith.constant 8 : i32
    %0 = arith.muli %arg1, %c8_i32 : i32
    %c0_i32 = arith.constant 0 : i32
    %c8_i32_0 = arith.constant 8 : i32
    %1 = arith.muli %c0_i32, %c8_i32_0 : i32
    %2 = tpu.assume_multiple %1, 8 : i32
    %3 = arith.addi %0, %2 : i32
    %c0_i32_1 = arith.constant 0 : i32
    %4 = arith.addi %3, %c0_i32_1 : i32
    %c4_i32 = arith.constant 4 : i32
    %5 = arith.muli %4, %c4_i32 : i32
    %c0_i32_2 = arith.constant 0 : i32
    %6 = arith.addi %5, %c0_i32_2 : i32
    %7 = arith.index_cast %arg0 : i32 to index
    %8 = arith.index_cast %6 : i32 to index
    %9 = memref.load %arg2[%7, %8] : memref<2x32xi32, #tpu.memory_space<smem>>
    %10 = arith.index_cast %9 : i32 to index
    %c0 = arith.constant 0 : index
    %11 = vector.load %arg3[%10, %c0] : memref<32x32xf32, #tpu.memory_space<vmem>>, vector<1x32xf32>
    %c0_3 = arith.constant 0 : index
    %c0_4 = arith.constant 0 : index
    %12 = vector.load %arg8[%c0_3, %c0_4] : memref<8x128xf32, #tpu.memory_space<vmem>>, vector<1x32xf32>
    tpu.vector_store %arg8[%c0_3, %c0_4], %11 {strides = array<i32>} : memref<8x128xf32, #tpu.memory_space<vmem>>, vector<1x32xf32>,
    %c4_i32_5 = arith.constant 4 : i32
    %13 = arith.muli %4, %c4_i32_5 : i32
    %c1_i32 = arith.constant 1 : i32
    %14 = arith.addi %13, %c1_i32 : i32
    %15 = arith.index_cast %arg0 : i32 to index
    %16 = arith.index_cast %14 : i32 to index
    %17 = memref.load %arg2[%15, %16] : memref<2x32xi32, #tpu.memory_space<smem>>
    %18 = arith.index_cast %17 : i32 to index
    %c0_6 = arith.constant 0 : index
    %19 = vector.load %arg3[%18, %c0_6] : memref<32x32xf32, #tpu.memory_space<vmem>>, vector<1x32xf32>
    %c0_7 = arith.constant 0 : index
    %c32 = arith.constant 32 : index
    %20 = vector.load %arg8[%c0_7, %c32] : memref<8x128xf32, #tpu.memory_space<vmem>>, vector<1x32xf32>
    tpu.vector_store %arg8[%c0_7, %c32], %19 {strides = array<i32>} : memref<8x128xf32, #tpu.memory_space<vmem>>, vector<1x32xf32>,
    %c4_i32_8 = arith.constant 4 : i32
    %21 = arith.muli %4, %c4_i32_8 : i32
    %c2_i32 = arith.constant 2 : i32
    %22 = arith.addi %21, %c2_i32 : i32
    %23 = arith.index_cast %arg0 : i32 to index
    %24 = arith.index_cast %22 : i32 to index
    %25 = memref.load %arg2[%23, %24] : memref<2x32xi32, #tpu.memory_space<smem>>
    %26 = arith.index_cast %25 : i32 to index
    %c0_9 = arith.constant 0 : index
    %27 = vector.load %arg3[%26, %c0_9] : memref<32x32xf32, #tpu.memory_space<vmem>>, vector<1x32xf32>
    %c0_10 = arith.constant 0 : index
    %c64 = arith.constant 64 : index
    %28 = vector.load %arg8[%c0_10, %c64] : memref<8x128xf32, #tpu.memory_space<vmem>>, vector<1x32xf32>
    tpu.vector_store %arg8[%c0_10, %c64], %27 {strides = array<i32>} : memref<8x128xf32, #tpu.memory_space<vmem>>, vector<1x32xf32>,
    %c4_i32_11 = arith.constant 4 : i32
    %29 = arith.muli %4, %c4_i32_11 : i32
    %c3_i32 = arith.constant 3 : i32
    %30 = arith.addi %29, %c3_i32 : i32
    %31 = arith.index_cast %arg0 : i32 to index
    %32 = arith.index_cast %30 : i32 to index
    %33 = memref.load %arg2[%31, %32] : memref<2x32xi32, #tpu.memory_space<smem>>
    %34 = arith.index_cast %33 : i32 to index
    %c0_12 = arith.constant 0 : index
    %35 = vector.load %arg3[%34, %c0_12] : memref<32x32xf32, #tpu.memory_space<vmem>>, vector<1x32xf32>
    %c0_13 = arith.constant 0 : index
    %c96 = arith.constant 96 : index
    %36 = vector.load %arg8[%c0_13, %c96] : memref<8x128xf32, #tpu.memory_space<vmem>>, vector<1x32xf32>
    tpu.vector_store %arg8[%c0_13, %c96], %35 {strides = array<i32>} : memref<8x128xf32, #tpu.memory_space<vmem>>, vector<1x32xf32>,
    %37 = arith.addi %0, %2 : i32
    %c1_i32_14 = arith.constant 1 : i32
    %38 = arith.addi %37, %c1_i32_14 : i32
    %c4_i32_15 = arith.constant 4 : i32
    %39 = arith.muli %38, %c4_i32_15 : i32
    %c0_i32_16 = arith.constant 0 : i32
    %40 = arith.addi %39, %c0_i32_16 : i32
    %41 = arith.index_cast %arg0 : i32 to index
    %42 = arith.index_cast %40 : i32 to index
    %43 = memref.load %arg2[%41, %42] : memref<2x32xi32, #tpu.memory_space<smem>>
    %44 = arith.index_cast %43 : i32 to index
    %c0_17 = arith.constant 0 : index
    %45 = vector.load %arg3[%44, %c0_17] : memref<32x32xf32, #tpu.memory_space<vmem>>, vector<1x32xf32>
    %c1 = arith.constant 1 : index
    %c0_18 = arith.constant 0 : index
    %46 = vector.load %arg8[%c1, %c0_18] : memref<8x128xf32, #tpu.memory_space<vmem>>, vector<1x32xf32>
    tpu.vector_store %arg8[%c1, %c0_18], %45 {strides = array<i32>} : memref<8x128xf32, #tpu.memory_space<vmem>>, vector<1x32xf32>,
    %c4_i32_19 = arith.constant 4 : i32
    %47 = arith.muli %38, %c4_i32_19 : i32
    %c1_i32_20 = arith.constant 1 : i32
    %48 = arith.addi %47, %c1_i32_20 : i32
    %49 = arith.index_cast %arg0 : i32 to index
    %50 = arith.index_cast %48 : i32 to index
    %51 = memref.load %arg2[%49, %50] : memref<2x32xi32, #tpu.memory_space<smem>>
    %52 = arith.index_cast %51 : i32 to index
    %c0_21 = arith.constant 0 : index
    %53 = vector.load %arg3[%52, %c0_21] : memref<32x32xf32, #tpu.memory_space<vmem>>, vector<1x32xf32>
    %c1_22 = arith.constant 1 : index
    %c32_23 = arith.constant 32 : index
    %54 = vector.load %arg8[%c1_22, %c32_23] : memref<8x128xf32, #tpu.memory_space<vmem>>, vector<1x32xf32>
    tpu.vector_store %arg8[%c1_22, %c32_23], %53 {strides = array<i32>} : memref<8x128xf32, #tpu.memory_space<vmem>>, vector<1x32xf32>,
    %c4_i32_24 = arith.constant 4 : i32
    %55 = arith.muli %38, %c4_i32_24 : i32
    %c2_i32_25 = arith.constant 2 : i32
    %56 = arith.addi %55, %c2_i32_25 : i32
    %57 = arith.index_cast %arg0 : i32 to index
    %58 = arith.index_cast %56 : i32 to index
    %59 = memref.load %arg2[%57, %58] : memref<2x32xi32, #tpu.memory_space<smem>>
    %60 = arith.index_cast %59 : i32 to index
    %c0_26 = arith.constant 0 : index
    %61 = vector.load %arg3[%60, %c0_26] : memref<32x32xf32, #tpu.memory_space<vmem>>, vector<1x32xf32>
    %c1_27 = arith.constant 1 : index
    %c64_28 = arith.constant 64 : index
    %62 = vector.load %arg8[%c1_27, %c64_28] : memref<8x128xf32, #tpu.memory_space<vmem>>, vector<1x32xf32>
    tpu.vector_store %arg8[%c1_27, %c64_28], %61 {strides = array<i32>} : memref<8x128xf32, #tpu.memory_space<vmem>>, vector<1x32xf32>,
    %c4_i32_29 = arith.constant 4 : i32
    %63 = arith.muli %38, %c4_i32_29 : i32
    %c3_i32_30 = arith.constant 3 : i32
    %64 = arith.addi %63, %c3_i32_30 : i32
    %65 = arith.index_cast %arg0 : i32 to index
    %66 = arith.index_cast %64 : i32 to index
    %67 = memref.load %arg2[%65, %66] : memref<2x32xi32, #tpu.memory_space<smem>>
    %68 = arith.index_cast %67 : i32 to index
    %c0_31 = arith.constant 0 : index
    %69 = vector.load %arg3[%68, %c0_31] : memref<32x32xf32, #tpu.memory_space<vmem>>, vector<1x32xf32>
    %c1_32 = arith.constant 1 : index
    %c96_33 = arith.constant 96 : index
    %70 = vector.load %arg8[%c1_32, %c96_33] : memref<8x128xf32, #tpu.memory_space<vmem>>, vector<1x32xf32>
    tpu.vector_store %arg8[%c1_32, %c96_33], %69 {strides = array<i32>} : memref<8x128xf32, #tpu.memory_space<vmem>>, vector<1x32xf32>,
    %71 = arith.addi %0, %2 : i32
    %c2_i32_34 = arith.constant 2 : i32
    %72 = arith.addi %71, %c2_i32_34 : i32
    %c4_i32_35 = arith.constant 4 : i32
    %73 = arith.muli %72, %c4_i32_35 : i32
    %c0_i32_36 = arith.constant 0 : i32
    %74 = arith.addi %73, %c0_i32_36 : i32
    %75 = arith.index_cast %arg0 : i32 to index
    %76 = arith.index_cast %74 : i32 to index
    %77 = memref.load %arg2[%75, %76] : memref<2x32xi32, #tpu.memory_space<smem>>
    %78 = arith.index_cast %77 : i32 to index
    %c0_37 = arith.constant 0 : index
    %79 = vector.load %arg3[%78, %c0_37] : memref<32x32xf32, #tpu.memory_space<vmem>>, vector<1x32xf32>
    %c2 = arith.constant 2 : index
    %c0_38 = arith.constant 0 : index
    %80 = vector.load %arg8[%c2, %c0_38] : memref<8x128xf32, #tpu.memory_space<vmem>>, vector<1x32xf32>
    tpu.vector_store %arg8[%c2, %c0_38], %79 {strides = array<i32>} : memref<8x128xf32, #tpu.memory_space<vmem>>, vector<1x32xf32>,
    %c4_i32_39 = arith.constant 4 : i32
    %81 = arith.muli %72, %c4_i32_39 : i32
    %c1_i32_40 = arith.constant 1 : i32
    %82 = arith.addi %81, %c1_i32_40 : i32
    %83 = arith.index_cast %arg0 : i32 to index
    %84 = arith.index_cast %82 : i32 to index
    %85 = memref.load %arg2[%83, %84] : memref<2x32xi32, #tpu.memory_space<smem>>
    %86 = arith.index_cast %85 : i32 to index
    %c0_41 = arith.constant 0 : index
    %87 = vector.load %arg3[%86, %c0_41] : memref<32x32xf32, #tpu.memory_space<vmem>>, vector<1x32xf32>
    %c2_42 = arith.constant 2 : index
    %c32_43 = arith.constant 32 : index
    %88 = vector.load %arg8[%c2_42, %c32_43] : memref<8x128xf32, #tpu.memory_space<vmem>>, vector<1x32xf32>
    tpu.vector_store %arg8[%c2_42, %c32_43], %87 {strides = array<i32>} : memref<8x128xf32, #tpu.memory_space<vmem>>, vector<1x32xf32>,
    %c4_i32_44 = arith.constant 4 : i32
    %89 = arith.muli %72, %c4_i32_44 : i32
    %c2_i32_45 = arith.constant 2 : i32
    %90 = arith.addi %89, %c2_i32_45 : i32
    %91 = arith.index_cast %arg0 : i32 to index
    %92 = arith.index_cast %90 : i32 to index
    %93 = memref.load %arg2[%91, %92] : memref<2x32xi32, #tpu.memory_space<smem>>
    %94 = arith.index_cast %93 : i32 to index
    %c0_46 = arith.constant 0 : index
    %95 = vector.load %arg3[%94, %c0_46] : memref<32x32xf32, #tpu.memory_space<vmem>>, vector<1x32xf32>
    %c2_47 = arith.constant 2 : index
    %c64_48 = arith.constant 64 : index
    %96 = vector.load %arg8[%c2_47, %c64_48] : memref<8x128xf32, #tpu.memory_space<vmem>>, vector<1x32xf32>
    tpu.vector_store %arg8[%c2_47, %c64_48], %95 {strides = array<i32>} : memref<8x128xf32, #tpu.memory_space<vmem>>, vector<1x32xf32>,
    %c4_i32_49 = arith.constant 4 : i32
    %97 = arith.muli %72, %c4_i32_49 : i32
    %c3_i32_50 = arith.constant 3 : i32
    %98 = arith.addi %97, %c3_i32_50 : i32
    %99 = arith.index_cast %arg0 : i32 to index
    %100 = arith.index_cast %98 : i32 to index
    %101 = memref.load %arg2[%99, %100] : memref<2x32xi32, #tpu.memory_space<smem>>
    %102 = arith.index_cast %101 : i32 to index
    %c0_51 = arith.constant 0 : index
    %103 = vector.load %arg3[%102, %c0_51] : memref<32x32xf32, #tpu.memory_space<vmem>>, vector<1x32xf32>
    %c2_52 = arith.constant 2 : index
    %c96_53 = arith.constant 96 : index
    %104 = vector.load %arg8[%c2_52, %c96_53] : memref<8x128xf32, #tpu.memory_space<vmem>>, vector<1x32xf32>
    tpu.vector_store %arg8[%c2_52, %c96_53], %103 {strides = array<i32>} : memref<8x128xf32, #tpu.memory_space<vmem>>, vector<1x32xf32>,
    %105 = arith.addi %0, %2 : i32
    %c3_i32_54 = arith.constant 3 : i32
    %106 = arith.addi %105, %c3_i32_54 : i32
    %c4_i32_55 = arith.constant 4 : i32
    %107 = arith.muli %106, %c4_i32_55 : i32
    %c0_i32_56 = arith.constant 0 : i32
    %108 = arith.addi %107, %c0_i32_56 : i32
    %109 = arith.index_cast %arg0 : i32 to index
    %110 = arith.index_cast %108 : i32 to index
    %111 = memref.load %arg2[%109, %110] : memref<2x32xi32, #tpu.memory_space<smem>>
    %112 = arith.index_cast %111 : i32 to index
    %c0_57 = arith.constant 0 : index
    %113 = vector.load %arg3[%112, %c0_57] : memref<32x32xf32, #tpu.memory_space<vmem>>, vector<1x32xf32>
    %c3 = arith.constant 3 : index
    %c0_58 = arith.constant 0 : index
    %114 = vector.load %arg8[%c3, %c0_58] : memref<8x128xf32, #tpu.memory_space<vmem>>, vector<1x32xf32>
    tpu.vector_store %arg8[%c3, %c0_58], %113 {strides = array<i32>} : memref<8x128xf32, #tpu.memory_space<vmem>>, vector<1x32xf32>,
    %c4_i32_59 = arith.constant 4 : i32
    %115 = arith.muli %106, %c4_i32_59 : i32
    %c1_i32_60 = arith.constant 1 : i32
    %116 = arith.addi %115, %c1_i32_60 : i32
    %117 = arith.index_cast %arg0 : i32 to index
    %118 = arith.index_cast %116 : i32 to index
    %119 = memref.load %arg2[%117, %118] : memref<2x32xi32, #tpu.memory_space<smem>>
    %120 = arith.index_cast %119 : i32 to index
    %c0_61 = arith.constant 0 : index
    %121 = vector.load %arg3[%120, %c0_61] : memref<32x32xf32, #tpu.memory_space<vmem>>, vector<1x32xf32>
    %c3_62 = arith.constant 3 : index
    %c32_63 = arith.constant 32 : index
    %122 = vector.load %arg8[%c3_62, %c32_63] : memref<8x128xf32, #tpu.memory_space<vmem>>, vector<1x32xf32>
    tpu.vector_store %arg8[%c3_62, %c32_63], %121 {strides = array<i32>} : memref<8x128xf32, #tpu.memory_space<vmem>>, vector<1x32xf32>,
    %c4_i32_64 = arith.constant 4 : i32
    %123 = arith.muli %106, %c4_i32_64 : i32
    %c2_i32_65 = arith.constant 2 : i32
    %124 = arith.addi %123, %c2_i32_65 : i32
    %125 = arith.index_cast %arg0 : i32 to index
    %126 = arith.index_cast %124 : i32 to index
    %127 = memref.load %arg2[%125, %126] : memref<2x32xi32, #tpu.memory_space<smem>>
    %128 = arith.index_cast %127 : i32 to index
    %c0_66 = arith.constant 0 : index
    %129 = vector.load %arg3[%128, %c0_66] : memref<32x32xf32, #tpu.memory_space<vmem>>, vector<1x32xf32>
    %c3_67 = arith.constant 3 : index
    %c64_68 = arith.constant 64 : index
    %130 = vector.load %arg8[%c3_67, %c64_68] : memref<8x128xf32, #tpu.memory_space<vmem>>, vector<1x32xf32>
    tpu.vector_store %arg8[%c3_67, %c64_68], %129 {strides = array<i32>} : memref<8x128xf32, #tpu.memory_space<vmem>>, vector<1x32xf32>,
    %c4_i32_69 = arith.constant 4 : i32
    %131 = arith.muli %106, %c4_i32_69 : i32
    %c3_i32_70 = arith.constant 3 : i32
    %132 = arith.addi %131, %c3_i32_70 : i32
    %133 = arith.index_cast %arg0 : i32 to index
    %134 = arith.index_cast %132 : i32 to index
    %135 = memref.load %arg2[%133, %134] : memref<2x32xi32, #tpu.memory_space<smem>>
    %136 = arith.index_cast %135 : i32 to index
    %c0_71 = arith.constant 0 : index
    %137 = vector.load %arg3[%136, %c0_71] : memref<32x32xf32, #tpu.memory_space<vmem>>, vector<1x32xf32>
    %c3_72 = arith.constant 3 : index
    %c96_73 = arith.constant 96 : index
    %138 = vector.load %arg8[%c3_72, %c96_73] : memref<8x128xf32, #tpu.memory_space<vmem>>, vector<1x32xf32>
    tpu.vector_store %arg8[%c3_72, %c96_73], %137 {strides = array<i32>} : memref<8x128xf32, #tpu.memory_space<vmem>>, vector<1x32xf32>,
    %139 = arith.addi %0, %2 : i32
    %c4_i32_74 = arith.constant 4 : i32
    %140 = arith.addi %139, %c4_i32_74 : i32
    %c4_i32_75 = arith.constant 4 : i32
    %141 = arith.muli %140, %c4_i32_75 : i32
    %c0_i32_76 = arith.constant 0 : i32
    %142 = arith.addi %141, %c0_i32_76 : i32
    %143 = arith.index_cast %arg0 : i32 to index
    %144 = arith.index_cast %142 : i32 to index
    %145 = memref.load %arg2[%143, %144] : memref<2x32xi32, #tpu.memory_space<smem>>
    %146 = arith.index_cast %145 : i32 to index
    %c0_77 = arith.constant 0 : index
    %147 = vector.load %arg3[%146, %c0_77] : memref<32x32xf32, #tpu.memory_space<vmem>>, vector<1x32xf32>
    %c4 = arith.constant 4 : index
    %c0_78 = arith.constant 0 : index
    %148 = vector.load %arg8[%c4, %c0_78] : memref<8x128xf32, #tpu.memory_space<vmem>>, vector<1x32xf32>
    tpu.vector_store %arg8[%c4, %c0_78], %147 {strides = array<i32>} : memref<8x128xf32, #tpu.memory_space<vmem>>, vector<1x32xf32>,
    %c4_i32_79 = arith.constant 4 : i32
    %149 = arith.muli %140, %c4_i32_79 : i32
    %c1_i32_80 = arith.constant 1 : i32
    %150 = arith.addi %149, %c1_i32_80 : i32
    %151 = arith.index_cast %arg0 : i32 to index
    %152 = arith.index_cast %150 : i32 to index
    %153 = memref.load %arg2[%151, %152] : memref<2x32xi32, #tpu.memory_space<smem>>
    %154 = arith.index_cast %153 : i32 to index
    %c0_81 = arith.constant 0 : index
    %155 = vector.load %arg3[%154, %c0_81] : memref<32x32xf32, #tpu.memory_space<vmem>>, vector<1x32xf32>
    %c4_82 = arith.constant 4 : index
    %c32_83 = arith.constant 32 : index
    %156 = vector.load %arg8[%c4_82, %c32_83] : memref<8x128xf32, #tpu.memory_space<vmem>>, vector<1x32xf32>
    tpu.vector_store %arg8[%c4_82, %c32_83], %155 {strides = array<i32>} : memref<8x128xf32, #tpu.memory_space<vmem>>, vector<1x32xf32>,
    %c4_i32_84 = arith.constant 4 : i32
    %157 = arith.muli %140, %c4_i32_84 : i32
    %c2_i32_85 = arith.constant 2 : i32
    %158 = arith.addi %157, %c2_i32_85 : i32
    %159 = arith.index_cast %arg0 : i32 to index
    %160 = arith.index_cast %158 : i32 to index
    %161 = memref.load %arg2[%159, %160] : memref<2x32xi32, #tpu.memory_space<smem>>
    %162 = arith.index_cast %161 : i32 to index
    %c0_86 = arith.constant 0 : index
    %163 = vector.load %arg3[%162, %c0_86] : memref<32x32xf32, #tpu.memory_space<vmem>>, vector<1x32xf32>
    %c4_87 = arith.constant 4 : index
    %c64_88 = arith.constant 64 : index
    %164 = vector.load %arg8[%c4_87, %c64_88] : memref<8x128xf32, #tpu.memory_space<vmem>>, vector<1x32xf32>
    tpu.vector_store %arg8[%c4_87, %c64_88], %163 {strides = array<i32>} : memref<8x128xf32, #tpu.memory_space<vmem>>, vector<1x32xf32>,
    %c4_i32_89 = arith.constant 4 : i32
    %165 = arith.muli %140, %c4_i32_89 : i32
    %c3_i32_90 = arith.constant 3 : i32
    %166 = arith.addi %165, %c3_i32_90 : i32
    %167 = arith.index_cast %arg0 : i32 to index
    %168 = arith.index_cast %166 : i32 to index
    %169 = memref.load %arg2[%167, %168] : memref<2x32xi32, #tpu.memory_space<smem>>
    %170 = arith.index_cast %169 : i32 to index
    %c0_91 = arith.constant 0 : index
    %171 = vector.load %arg3[%170, %c0_91] : memref<32x32xf32, #tpu.memory_space<vmem>>, vector<1x32xf32>
    %c4_92 = arith.constant 4 : index
    %c96_93 = arith.constant 96 : index
    %172 = vector.load %arg8[%c4_92, %c96_93] : memref<8x128xf32, #tpu.memory_space<vmem>>, vector<1x32xf32>
    tpu.vector_store %arg8[%c4_92, %c96_93], %171 {strides = array<i32>} : memref<8x128xf32, #tpu.memory_space<vmem>>, vector<1x32xf32>,
    %173 = arith.addi %0, %2 : i32
    %c5_i32 = arith.constant 5 : i32
    %174 = arith.addi %173, %c5_i32 : i32
    %c4_i32_94 = arith.constant 4 : i32
    %175 = arith.muli %174, %c4_i32_94 : i32
    %c0_i32_95 = arith.constant 0 : i32
    %176 = arith.addi %175, %c0_i32_95 : i32
    %177 = arith.index_cast %arg0 : i32 to index
    %178 = arith.index_cast %176 : i32 to index
    %179 = memref.load %arg2[%177, %178] : memref<2x32xi32, #tpu.memory_space<smem>>
    %180 = arith.index_cast %179 : i32 to index
    %c0_96 = arith.constant 0 : index
    %181 = vector.load %arg3[%180, %c0_96] : memref<32x32xf32, #tpu.memory_space<vmem>>, vector<1x32xf32>
    %c5 = arith.constant 5 : index
    %c0_97 = arith.constant 0 : index
    %182 = vector.load %arg8[%c5, %c0_97] : memref<8x128xf32, #tpu.memory_space<vmem>>, vector<1x32xf32>
    tpu.vector_store %arg8[%c5, %c0_97], %181 {strides = array<i32>} : memref<8x128xf32, #tpu.memory_space<vmem>>, vector<1x32xf32>,
    %c4_i32_98 = arith.constant 4 : i32
    %183 = arith.muli %174, %c4_i32_98 : i32
    %c1_i32_99 = arith.constant 1 : i32
    %184 = arith.addi %183, %c1_i32_99 : i32
    %185 = arith.index_cast %arg0 : i32 to index
    %186 = arith.index_cast %184 : i32 to index
    %187 = memref.load %arg2[%185, %186] : memref<2x32xi32, #tpu.memory_space<smem>>
    %188 = arith.index_cast %187 : i32 to index
    %c0_100 = arith.constant 0 : index
    %189 = vector.load %arg3[%188, %c0_100] : memref<32x32xf32, #tpu.memory_space<vmem>>, vector<1x32xf32>
    %c5_101 = arith.constant 5 : index
    %c32_102 = arith.constant 32 : index
    %190 = vector.load %arg8[%c5_101, %c32_102] : memref<8x128xf32, #tpu.memory_space<vmem>>, vector<1x32xf32>
    tpu.vector_store %arg8[%c5_101, %c32_102], %189 {strides = array<i32>} : memref<8x128xf32, #tpu.memory_space<vmem>>, vector<1x32xf32>,
    %c4_i32_103 = arith.constant 4 : i32
    %191 = arith.muli %174, %c4_i32_103 : i32
    %c2_i32_104 = arith.constant 2 : i32
    %192 = arith.addi %191, %c2_i32_104 : i32
    %193 = arith.index_cast %arg0 : i32 to index
    %194 = arith.index_cast %192 : i32 to index
    %195 = memref.load %arg2[%193, %194] : memref<2x32xi32, #tpu.memory_space<smem>>
    %196 = arith.index_cast %195 : i32 to index
    %c0_105 = arith.constant 0 : index
    %197 = vector.load %arg3[%196, %c0_105] : memref<32x32xf32, #tpu.memory_space<vmem>>, vector<1x32xf32>
    %c5_106 = arith.constant 5 : index
    %c64_107 = arith.constant 64 : index
    %198 = vector.load %arg8[%c5_106, %c64_107] : memref<8x128xf32, #tpu.memory_space<vmem>>, vector<1x32xf32>
    tpu.vector_store %arg8[%c5_106, %c64_107], %197 {strides = array<i32>} : memref<8x128xf32, #tpu.memory_space<vmem>>, vector<1x32xf32>,
    %c4_i32_108 = arith.constant 4 : i32
    %199 = arith.muli %174, %c4_i32_108 : i32
    %c3_i32_109 = arith.constant 3 : i32
    %200 = arith.addi %199, %c3_i32_109 : i32
    %201 = arith.index_cast %arg0 : i32 to index
    %202 = arith.index_cast %200 : i32 to index
    %203 = memref.load %arg2[%201, %202] : memref<2x32xi32, #tpu.memory_space<smem>>
    %204 = arith.index_cast %203 : i32 to index
    %c0_110 = arith.constant 0 : index
    %205 = vector.load %arg3[%204, %c0_110] : memref<32x32xf32, #tpu.memory_space<vmem>>, vector<1x32xf32>
    %c5_111 = arith.constant 5 : index
    %c96_112 = arith.constant 96 : index
    %206 = vector.load %arg8[%c5_111, %c96_112] : memref<8x128xf32, #tpu.memory_space<vmem>>, vector<1x32xf32>
    tpu.vector_store %arg8[%c5_111, %c96_112], %205 {strides = array<i32>} : memref<8x128xf32, #tpu.memory_space<vmem>>, vector<1x32xf32>,
    %207 = arith.addi %0, %2 : i32
    %c6_i32 = arith.constant 6 : i32
    %208 = arith.addi %207, %c6_i32 : i32
    %c4_i32_113 = arith.constant 4 : i32
    %209 = arith.muli %208, %c4_i32_113 : i32
    %c0_i32_114 = arith.constant 0 : i32
    %210 = arith.addi %209, %c0_i32_114 : i32
    %211 = arith.index_cast %arg0 : i32 to index
    %212 = arith.index_cast %210 : i32 to index
    %213 = memref.load %arg2[%211, %212] : memref<2x32xi32, #tpu.memory_space<smem>>
    %214 = arith.index_cast %213 : i32 to index
    %c0_115 = arith.constant 0 : index
    %215 = vector.load %arg3[%214, %c0_115] : memref<32x32xf32, #tpu.memory_space<vmem>>, vector<1x32xf32>
    %c6 = arith.constant 6 : index
    %c0_116 = arith.constant 0 : index
    %216 = vector.load %arg8[%c6, %c0_116] : memref<8x128xf32, #tpu.memory_space<vmem>>, vector<1x32xf32>
    tpu.vector_store %arg8[%c6, %c0_116], %215 {strides = array<i32>} : memref<8x128xf32, #tpu.memory_space<vmem>>, vector<1x32xf32>,
    %c4_i32_117 = arith.constant 4 : i32
    %217 = arith.muli %208, %c4_i32_117 : i32
    %c1_i32_118 = arith.constant 1 : i32
    %218 = arith.addi %217, %c1_i32_118 : i32
    %219 = arith.index_cast %arg0 : i32 to index
    %220 = arith.index_cast %218 : i32 to index
    %221 = memref.load %arg2[%219, %220] : memref<2x32xi32, #tpu.memory_space<smem>>
    %222 = arith.index_cast %221 : i32 to index
    %c0_119 = arith.constant 0 : index
    %223 = vector.load %arg3[%222, %c0_119] : memref<32x32xf32, #tpu.memory_space<vmem>>, vector<1x32xf32>
    %c6_120 = arith.constant 6 : index
    %c32_121 = arith.constant 32 : index
    %224 = vector.load %arg8[%c6_120, %c32_121] : memref<8x128xf32, #tpu.memory_space<vmem>>, vector<1x32xf32>
    tpu.vector_store %arg8[%c6_120, %c32_121], %223 {strides = array<i32>} : memref<8x128xf32, #tpu.memory_space<vmem>>, vector<1x32xf32>,
    %c4_i32_122 = arith.constant 4 : i32
    %225 = arith.muli %208, %c4_i32_122 : i32
    %c2_i32_123 = arith.constant 2 : i32
    %226 = arith.addi %225, %c2_i32_123 : i32
    %227 = arith.index_cast %arg0 : i32 to index
    %228 = arith.index_cast %226 : i32 to index
    %229 = memref.load %arg2[%227, %228] : memref<2x32xi32, #tpu.memory_space<smem>>
    %230 = arith.index_cast %229 : i32 to index
    %c0_124 = arith.constant 0 : index
    %231 = vector.load %arg3[%230, %c0_124] : memref<32x32xf32, #tpu.memory_space<vmem>>, vector<1x32xf32>
    %c6_125 = arith.constant 6 : index
    %c64_126 = arith.constant 64 : index
    %232 = vector.load %arg8[%c6_125, %c64_126] : memref<8x128xf32, #tpu.memory_space<vmem>>, vector<1x32xf32>
    tpu.vector_store %arg8[%c6_125, %c64_126], %231 {strides = array<i32>} : memref<8x128xf32, #tpu.memory_space<vmem>>, vector<1x32xf32>,
    %c4_i32_127 = arith.constant 4 : i32
    %233 = arith.muli %208, %c4_i32_127 : i32
    %c3_i32_128 = arith.constant 3 : i32
    %234 = arith.addi %233, %c3_i32_128 : i32
    %235 = arith.index_cast %arg0 : i32 to index
    %236 = arith.index_cast %234 : i32 to index
    %237 = memref.load %arg2[%235, %236] : memref<2x32xi32, #tpu.memory_space<smem>>
    %238 = arith.index_cast %237 : i32 to index
    %c0_129 = arith.constant 0 : index
    %239 = vector.load %arg3[%238, %c0_129] : memref<32x32xf32, #tpu.memory_space<vmem>>, vector<1x32xf32>
    %c6_130 = arith.constant 6 : index
    %c96_131 = arith.constant 96 : index
    %240 = vector.load %arg8[%c6_130, %c96_131] : memref<8x128xf32, #tpu.memory_space<vmem>>, vector<1x32xf32>
    tpu.vector_store %arg8[%c6_130, %c96_131], %239 {strides = array<i32>} : memref<8x128xf32, #tpu.memory_space<vmem>>, vector<1x32xf32>,
    %241 = arith.addi %0, %2 : i32
    %c7_i32 = arith.constant 7 : i32
    %242 = arith.addi %241, %c7_i32 : i32
    %c4_i32_132 = arith.constant 4 : i32
    %243 = arith.muli %242, %c4_i32_132 : i32
    %c0_i32_133 = arith.constant 0 : i32
    %244 = arith.addi %243, %c0_i32_133 : i32
    %245 = arith.index_cast %arg0 : i32 to index
    %246 = arith.index_cast %244 : i32 to index
    %247 = memref.load %arg2[%245, %246] : memref<2x32xi32, #tpu.memory_space<smem>>
    %248 = arith.index_cast %247 : i32 to index
    %c0_134 = arith.constant 0 : index
    %249 = vector.load %arg3[%248, %c0_134] : memref<32x32xf32, #tpu.memory_space<vmem>>, vector<1x32xf32>
    %c7 = arith.constant 7 : index
    %c0_135 = arith.constant 0 : index
    %250 = vector.load %arg8[%c7, %c0_135] : memref<8x128xf32, #tpu.memory_space<vmem>>, vector<1x32xf32>
    tpu.vector_store %arg8[%c7, %c0_135], %249 {strides = array<i32>} : memref<8x128xf32, #tpu.memory_space<vmem>>, vector<1x32xf32>,
    %c4_i32_136 = arith.constant 4 : i32
    %251 = arith.muli %242, %c4_i32_136 : i32
    %c1_i32_137 = arith.constant 1 : i32
    %252 = arith.addi %251, %c1_i32_137 : i32
    %253 = arith.index_cast %arg0 : i32 to index
    %254 = arith.index_cast %252 : i32 to index
    %255 = memref.load %arg2[%253, %254] : memref<2x32xi32, #tpu.memory_space<smem>>
    %256 = arith.index_cast %255 : i32 to index
    %c0_138 = arith.constant 0 : index
    %257 = vector.load %arg3[%256, %c0_138] : memref<32x32xf32, #tpu.memory_space<vmem>>, vector<1x32xf32>
    %c7_139 = arith.constant 7 : index
    %c32_140 = arith.constant 32 : index
    %258 = vector.load %arg8[%c7_139, %c32_140] : memref<8x128xf32, #tpu.memory_space<vmem>>, vector<1x32xf32>
    tpu.vector_store %arg8[%c7_139, %c32_140], %257 {strides = array<i32>} : memref<8x128xf32, #tpu.memory_space<vmem>>, vector<1x32xf32>,
    %c4_i32_141 = arith.constant 4 : i32
    %259 = arith.muli %242, %c4_i32_141 : i32
    %c2_i32_142 = arith.constant 2 : i32
    %260 = arith.addi %259, %c2_i32_142 : i32
    %261 = arith.index_cast %arg0 : i32 to index
    %262 = arith.index_cast %260 : i32 to index
    %263 = memref.load %arg2[%261, %262] : memref<2x32xi32, #tpu.memory_space<smem>>
    %264 = arith.index_cast %263 : i32 to index
    %c0_143 = arith.constant 0 : index
    %265 = vector.load %arg3[%264, %c0_143] : memref<32x32xf32, #tpu.memory_space<vmem>>, vector<1x32xf32>
    %c7_144 = arith.constant 7 : index
    %c64_145 = arith.constant 64 : index
    %266 = vector.load %arg8[%c7_144, %c64_145] : memref<8x128xf32, #tpu.memory_space<vmem>>, vector<1x32xf32>
    tpu.vector_store %arg8[%c7_144, %c64_145], %265 {strides = array<i32>} : memref<8x128xf32, #tpu.memory_space<vmem>>, vector<1x32xf32>,
    %c4_i32_146 = arith.constant 4 : i32
    %267 = arith.muli %242, %c4_i32_146 : i32
    %c3_i32_147 = arith.constant 3 : i32
    %268 = arith.addi %267, %c3_i32_147 : i32
    %269 = arith.index_cast %arg0 : i32 to index
    %270 = arith.index_cast %268 : i32 to index
    %271 = memref.load %arg2[%269, %270] : memref<2x32xi32, #tpu.memory_space<smem>>
    %272 = arith.index_cast %271 : i32 to index
    %c0_148 = arith.constant 0 : index
    %273 = vector.load %arg3[%272, %c0_148] : memref<32x32xf32, #tpu.memory_space<vmem>>, vector<1x32xf32>
    %c7_149 = arith.constant 7 : index
    %c96_150 = arith.constant 96 : index
    %274 = vector.load %arg8[%c7_149, %c96_150] : memref<8x128xf32, #tpu.memory_space<vmem>>, vector<1x32xf32>
    tpu.vector_store %arg8[%c7_149, %c96_150], %273 {strides = array<i32>} : memref<8x128xf32, #tpu.memory_space<vmem>>, vector<1x32xf32>,
    %c0_151 = arith.constant 0 : index
    %c0_152 = arith.constant 0 : index
    %275 = vector.load %arg8[%c0_151, %c0_152] : memref<8x128xf32, #tpu.memory_space<vmem>>, vector<8x128xf32>
    %276 = arith.index_cast %2 : i32 to index
    %c0_153 = arith.constant 0 : index
    %277 = vector.load %arg4[%276, %c0_153] : memref<8x128xf32, #tpu.memory_space<vmem>>, vector<8x128xf32>
    %278 = arith.addf %275, %277 : vector<8x128xf32>
    %c0_154 = arith.constant 0 : index
    %279 = arith.index_cast %2 : i32 to index
    %c0_155 = arith.constant 0 : index
    %280 = vector.load %arg6[%c0_154, %279, %c0_155] : memref<1x8x128xf32, #tpu.memory_space<vmem>>, vector<1x8x128xf32>
    %281 = vector.shape_cast %280 : vector<1x8x128xf32> to vector<8x128xf32>
    %282 = vector.shape_cast %278 : vector<8x128xf32> to vector<1x8x128xf32>
    tpu.vector_store %arg6[%c0_154, %279, %c0_155], %282 {strides = array<i32>} : memref<1x8x128xf32, #tpu.memory_space<vmem>>, vector<1x8x128xf32>,
    %c1_i32_156 = arith.constant 1 : i32
    %c32_i32 = arith.constant 32 : i32
    %283 = arith.muli %arg1, %c32_i32 : i32
    %284 = tpu.iota {dimensions = array<i32: 0>} : vector<32x16xi32>
    %285 = vector.broadcast %283 : i32 to vector<32x16xi32>
    %286 = arith.addi %285, %284 : vector<32x16xi32>
    %287 = arith.sitofp %286 : vector<32x16xi32> to vector<32x16xf32>
    %c0_157 = arith.constant 0 : index
    %c0_158 = arith.constant 0 : index
    %288 = vector.load %arg5[%c0_157, %c0_158] : memref<1x16xf32, #tpu.memory_space<vmem>>, vector<1x16xf32>
    %289 = vector.broadcast %288 : vector<1x16xf32> to vector<32x16xf32>
    %290 = arith.mulf %287, %289 : vector<32x16xf32>
    %c0_159 = arith.constant 0 : index
    %c0_160 = arith.constant 0 : index
    %c0_161 = arith.constant 0 : index
    %291 = vector.load %arg7[%c0_159, %c0_160, %c0_161] : memref<1x32x16xf32, #tpu.memory_space<vmem>>, vector<1x32x16xf32>
    %292 = vector.shape_cast %291 : vector<1x32x16xf32> to vector<32x16xf32>
    %293 = vector.shape_cast %290 : vector<32x16xf32> to vector<1x32x16xf32>
    tpu.vector_store %arg7[%c0_159, %c0_160, %c0_161], %293 {strides = array<i32>} : memref<1x32x16xf32, #tpu.memory_space<vmem>>, vector<1x32x16xf32>,
    return
  }
  func.func @transform_0(%arg0: i32, %arg1: i32, %arg2: memref<2x32xi32, #tpu.memory_space<smem>>) -> (i32, i32) {
    %c0_i32 = arith.constant 0 : i32
    %c0_i32_0 = arith.constant 0 : i32
    %c0_i32_1 = arith.constant 0 : i32
    return %c0_i32, %c0_i32_0 : i32, i32
  }
  func.func @transform_1(%arg0: i32, %arg1: i32, %arg2: memref<2x32xi32, #tpu.memory_space<smem>>) -> (i32, i32) {
    %c0_i32 = arith.constant 0 : i32
    %c0_i32_0 = arith.constant 0 : i32
    return %arg1, %c0_i32 : i32, i32
  }
  func.func @transform_2(%arg0: i32, %arg1: i32, %arg2: memref<2x32xi32, #tpu.memory_space<smem>>) -> (i32, i32) {
    %c0_i32 = arith.constant 0 : i32
    %c0_i32_0 = arith.constant 0 : i32
    %c0_i32_1 = arith.constant 0 : i32
    return %c0_i32, %c0_i32_0 : i32, i32
  }
  func.func @transform_3(%arg0: i32, %arg1: i32, %arg2: memref<2x32xi32, #tpu.memory_space<smem>>) -> (i32, i32, i32) {
    %c0_i32 = arith.constant 0 : i32
    %c0_i32_0 = arith.constant 0 : i32
    return %arg0, %arg1, %c0_i32 : i32, i32, i32
  }
  func.func @transform_4(%arg0: i32, %arg1: i32, %arg2: memref<2x32xi32, #tpu.memory_space<smem>>) -> (i32, i32, i32) {
    %c0_i32 = arith.constant 0 : i32
    %c0_i32_0 = arith.constant 0 : i32
    return %arg0, %arg1, %c0_i32 : i32, i32, i32
  }
}

</mosaic_0001>

<llo_original>
// kernel: tpu_custom_call.1
$region0: #{tpu_custom_call.1}
  #allocation0 [shape = 'u32[]', space=smem, size = 0x4, offset = 0x4, fixed_abs, tag = 'smem constant byte address 0x4 - core index']
  #allocation1 [shape = 'u32[144,128]{1,0:T(1,128)}', space=vmem, size = 0x12000, scoped, tag = 'internal scratch']
  #allocation2 [shape = 'f32[8,128]{1,0:T(8,128)}', space=vmem, size = 0x1000, scoped, tag = 'scratch operand']
  #allocation3 [shape = 's32[1]{0}', space=sflag, size = 0x4, scoped, tag = 'scoped memory for tpu_custom_call.1']
  #allocation4 [shape = 'u8[1024]{0}', space=smem, size = 0x400, scoped, tag = 'prefetched SMEM operand 0']
  %s0 = inlined_call_operand.hbm [shape: s32[2,32], index: 0, kind: input, shape index: {}]
  %s1 = inlined_call_operand.hbm [shape: f32[32,32], index: 1, kind: input, shape index: {}]
  %s2 = inlined_call_operand.hbm [shape: f32[8,128], index: 2, kind: input, shape index: {}]
  %s3 = inlined_call_operand.vmem [shape: f32[1,16], index: 3, kind: input, shape index: {}]
  %s4 = inlined_call_operand.hbm [shape: f32[2,8,128], index: 4, kind: output, shape index: {0}]
  %s5 = inlined_call_operand.vmem [shape: f32[2,32,16], index: 5, kind: output, shape index: {1}]
  %6 = xla_tuple %s4, %s5
  %s7 = sld [smem:[#allocation0]]
  $region61: #{tpu_custom_call.1} parent=0
    _
  %s9 = ssub.s32 1, %s7
  %s10 = scalar_select 0, %s9, %s7
  %12 = dma.hbm_to_smem %s0, 32, [#allocation4], [#allocation3]
  %13 = dma.done [#allocation3], 32
  %14 = sfence
  $region1: #{tpu_custom_call.1} parent=0
    #allocation5 [shape = 'u8[16384]{0}', space=vmem, size = 0x4000, scoped, tag = 'input window, operand 1, single buffered']
    #allocation6 [shape = 's32[2]{0}', space=sflag, size = 0x8, scoped, tag = 'scoped memory for tpu_custom_call.1']
    #allocation7 [shape = 's32[2]{0}', space=sflag, size = 0x8, scoped, tag = 'scoped memory for tpu_custom_call.1']
    #allocation8 [shape = 'u8[4096]{0}', space=vmem, size = 0x1000, scoped, tag = 'input window, operand 2, single buffered']
    #allocation9 [shape = 's32[1]{0}', space=sflag, size = 0x4, scoped, tag = 'scoped memory for tpu_custom_call.1']
    #allocation10 [shape = 'u8[8192]{0}', space=vmem, size = 0x2000, scoped, tag = 'output window, operand 0']
    %15 = vsyncpa [#allocation6], 0
    %16 = vsyncpa [#allocation9], 0
    %17 = vsyncpa [#allocation7], 0
    %s18 = scalar_lea.sflag [#allocation7], 1
    %19 = vsyncpa %s18, 0
    loop: start=0, step=1, limit=4
    $region2: #{tpu_custom_call.1} parent=1 // loop_pre_header
      _
    $region3: #{tpu_custom_call.1} parent=1 // loop_header
      %s21 = sphi 0, %s25
      %p22 = scmp.ge.s32.totalorder %s21, 4
      %s28 = sphi 0, %s40
      %s29 = sphi 0, %s36
      %s30 = sphi 0, %s28
      %s31 = sphi 0, %s29
      %s32 = sphi 0, %s30
      %s33 = sphi 0, %s31
      %s41 = sphi 0, %s41
      %s43 = sphi 0, %s41
      %s44 = sphi 0, %s43
      %s58 = sphi 0, %s44
      %s64 = sphi 0, %s66
      %s67 = sphi 0, %s64
      %s68 = sphi 0, %s67
      %s84 = sphi 0, %s68
      %s88 = sphi 0, %s88
      %s90 = sphi 0, %s88
      %s91 = sphi 0, %s90
      %s105 = sphi 0, %s91
      %s113 = sphi 0, %s115
      %s116 = sphi 0, %s113
      %s117 = sphi 0, %s116
      %s133 = sphi 0, %s117
      %s141 = sphi 0, %s143
      %s144 = sphi 0, %s141
      %s145 = sphi 0, %s144
      %s161 = sphi 0, %s145
    $region4: #{tpu_custom_call.1} parent=1 // loop_header_branch
      %24 = sbr.rel (%p22) target = $region8
    $region5: #{tpu_custom_call.1} parent=1 // loop_body
      %s26 = ssub.s32 %s21, 1
      %s27 = ssub.s32 %s21, 2
      %s34 = sadd.s32 1, %s29
      %p35 = scmp.ge.s32.totalorder %s34, 1
      %s36 = scalar_select %p35, 0, %s34
      %s37 = sadd.s32 1, %s28
      %s38 = scalar_select %p35, %s37, %s28
      %p39 = scmp.ge.s32.totalorder %s38, 2
      %s40 = scalar_select %p39, 0, %s38
      %s42 = sadd.s32 %s41, 1
      %p45 = scmp.eq.s32.totalorder %s21, 1
      %p46 = scmp.ne.s32.totalorder %s41, %s43
      %p47 = scmp.eq.s32.totalorder %s21, 0
      %p48 = por %p46, %p47
      %p49 = scmp.ne.s32.totalorder %s41, %s43
      %p50 = scmp.eq.s32.totalorder %s26, 1
      %p51 = por %p49, %p50
      %p52 = scmp.ne.s32.totalorder %s43, %s44
      %p53 = scmp.eq.s32.totalorder %s26, 0
      %p54 = por %p52, %p53
      %p55 = scmp.ne.s32.totalorder %s43, %s44
      %p56 = scmp.eq.s32.totalorder %s27, 1
      %p57 = por %p55, %p56
      %p59 = scmp.ne.s32.totalorder %s44, %s58
      %p60 = scmp.eq.s32.totalorder %s27, 0
      %p61 = por %p59, %p60
      %s62 = ssub.s32 %s29, %s36
      %p63 = scmp.eq.s32.totalorder %s62, 0
      %s65 = sadd.s32 %s64, 1
      %s66 = scalar_select %p63, %s64, %s65
      %p69 = pneg %p63
      %p70 = scmp.eq.s32.totalorder %s21, 1
      %p71 = por %p69, %p70
      %p72 = scmp.ne.s32.totalorder %s64, %s67
      %p73 = scmp.eq.s32.totalorder %s21, 0
      %p74 = por %p72, %p73
      %p75 = scmp.ne.s32.totalorder %s64, %s67
      %p76 = scmp.eq.s32.totalorder %s26, 1
      %p77 = por %p75, %p76
      %p78 = scmp.ne.s32.totalorder %s67, %s68
      %p79 = scmp.eq.s32.totalorder %s26, 0
      %p80 = por %p78, %p79
      %p81 = scmp.ne.s32.totalorder %s67, %s68
      %p82 = scmp.eq.s32.totalorder %s27, 1
      %p83 = por %p81, %p82
      %p85 = scmp.ne.s32.totalorder %s68, %s84
      %p86 = scmp.eq.s32.totalorder %s27, 0
      %p87 = por %p85, %p86
      %s89 = sadd.s32 %s88, 1
      %p92 = scmp.eq.s32.totalorder %s21, 1
      %p93 = scmp.ne.s32.totalorder %s88, %s90
      %p94 = scmp.eq.s32.totalorder %s21, 0
      %p95 = por %p93, %p94
      %p96 = scmp.ne.s32.totalorder %s88, %s90
      %p97 = scmp.eq.s32.totalorder %s26, 1
      %p98 = por %p96, %p97
      %p99 = scmp.ne.s32.totalorder %s90, %s91
      %p100 = scmp.eq.s32.totalorder %s26, 0
      %p101 = por %p99, %p100
      %p102 = scmp.ne.s32.totalorder %s90, %s91
      %p103 = scmp.eq.s32.totalorder %s27, 1
      %p104 = por %p102, %p103
      %p106 = scmp.ne.s32.totalorder %s91, %s105
      %p107 = scmp.eq.s32.totalorder %s27, 0
      %p108 = por %p106, %p107
      %s109 = ssub.s32 %s28, %s40
      %s110 = ssub.s32 %s29, %s36
      %s111 = sor.u32 %s109, %s110
      %p112 = scmp.eq.s32.totalorder %s111, 0
      %s114 = sadd.s32 %s113, 1
      %s115 = scalar_select %p112, %s113, %s114
      %p118 = pneg %p112
      %p119 = scmp.eq.s32.totalorder %s21, 1
      %p120 = por %p118, %p119
      %p121 = scmp.ne.s32.totalorder %s113, %s116
      %p122 = scmp.eq.s32.totalorder %s21, 0
      %p123 = por %p121, %p122
      %p124 = scmp.ne.s32.totalorder %s113, %s116
      %p125 = scmp.eq.s32.totalorder %s26, 1
      %p126 = por %p124, %p125
      %p127 = scmp.ne.s32.totalorder %s116, %s117
      %p128 = scmp.eq.s32.totalorder %s26, 0
      %p129 = por %p127, %p128
      %p130 = scmp.ne.s32.totalorder %s116, %s117
      %p131 = scmp.eq.s32.totalorder %s27, 1
      %p132 = por %p130, %p131
      %p134 = scmp.ne.s32.totalorder %s117, %s133
      %p135 = scmp.eq.s32.totalorder %s27, 0
      %p136 = por %p134, %p135
      %s137 = ssub.s32 %s28, %s40
      %s138 = ssub.s32 %s29, %s36
      %s139 = sor.u32 %s137, %s138
      %p140 = scmp.eq.s32.totalorder %s139, 0
      %s142 = sadd.s32 %s141, 1
      %s143 = scalar_select %p140, %s141, %s142
      %p146 = pneg %p140
      %p147 = scmp.eq.s32.totalorder %s21, 1
      %p148 = por %p146, %p147
      %p149 = scmp.ne.s32.totalorder %s141, %s144
      %p150 = scmp.eq.s32.totalorder %s21, 0
      %p151 = por %p149, %p150
      %p152 = scmp.ne.s32.totalorder %s141, %s144
      %p153 = scmp.eq.s32.totalorder %s26, 1
      %p154 = por %p152, %p153
      %p155 = scmp.ne.s32.totalorder %s144, %s145
      %p156 = scmp.eq.s32.totalorder %s26, 0
      %p157 = por %p155, %p156
      %p158 = scmp.ne.s32.totalorder %s144, %s145
      %p159 = scmp.eq.s32.totalorder %s27, 1
      %p160 = por %p158, %p159
      %p162 = scmp.ne.s32.totalorder %s145, %s161
      %p163 = scmp.eq.s32.totalorder %s27, 0
      %p164 = por %p162, %p163
      %p165 = scmp.le.s32.totalorder 1, %s21
      %p166 = scmp.lt.s32.totalorder %s21, 3
      %p167 = pnand %p165, %p166
      %p168 = pneg %p167
      // Predicated region
      $region9: #{tpu_custom_call.1} parent=5 // pred_check
        _
      $region10: #{tpu_custom_call.1} parent=5 // pred_check_branch
        %170 = sbr.rel (%p167) target = $region12
      $region11: #{tpu_custom_call.1} parent=5 // pred_region
        %s171 = ssub.s32 %s21, 1
        // Predicated region
        $region13: #{tpu_custom_call.1} parent=11 // pred_check
          %p172 = pneg %p54
        $region14: #{tpu_custom_call.1} parent=11 // pred_check_branch
          %174 = sbr.rel (%p172) target = $region16
        $region15: #{tpu_custom_call.1} parent=11 // pred_region
          %s176 = ssub.s32 512, 512
          %177 = vsyncadd [#allocation6], %s176
          %s178 = sshll.u32 [#allocation5], 4
          %s179 = int_to_ptr.vmem [resolvable:$true] %s178
          %184 = dma.hbm_to_vmem [thread:$0]  %s1, 512, %s179, [#allocation6], 128, 128, 8
        $region16: #{tpu_custom_call.1} parent=11 // pred_fallthru
          _
        // Predicated region
        $region17: #{tpu_custom_call.1} parent=11 // pred_check
          %p185 = pneg %p80
        $region18: #{tpu_custom_call.1} parent=11 // pred_check_branch
          %187 = sbr.rel (%p185) target = $region20
        $region19: #{tpu_custom_call.1} parent=11 // pred_region
          %s189 = ssub.s32 128, 128
          %190 = vsyncadd [#allocation9], %s189
          %s191 = smul.addr %s31, 128
          %s192 = scalar_lea.hbm %s2, %s191
          %s194 = sshll.u32 [#allocation8], 4
          %s195 = int_to_ptr.vmem [resolvable:$true] %s194
          %197 = dma.hbm_to_vmem [thread:$0]  %s192, 128, %s195, [#allocation9]
        $region20: #{tpu_custom_call.1} parent=11 // pred_fallthru
          _
        // Predicated region
        $region21: #{tpu_custom_call.1} parent=11 // pred_check
          %p198 = pneg %p101
        $region22: #{tpu_custom_call.1} parent=11 // pred_check_branch
          %200 = sbr.rel (%p198) target = $region24
        $region23: #{tpu_custom_call.1} parent=11 // pred_region
          _
        $region24: #{tpu_custom_call.1} parent=11 // pred_fallthru
          _
      $region12: #{tpu_custom_call.1} parent=5 // pred_fallthru
        _
      %p201 = scmp.lt.s32.totalorder %s21, 2
      // Predicated region
      $region25: #{tpu_custom_call.1} parent=5 // pred_check
        %p202 = pneg %p201
      $region26: #{tpu_custom_call.1} parent=5 // pred_check_branch
        %204 = sbr.rel (%p202) target = $region28
      $region27: #{tpu_custom_call.1} parent=5 // pred_region
        _
      $region28: #{tpu_custom_call.1} parent=5 // pred_fallthru
        _
      %p205 = scmp.le.s32.totalorder 1, %s21
      %p206 = scmp.lt.s32.totalorder %s21, 3
      %p207 = pnand %p205, %p206
      %p208 = pneg %p207
      // Predicated region
      $region29: #{tpu_custom_call.1} parent=5 // pred_check
        _
      $region30: #{tpu_custom_call.1} parent=5 // pred_check_branch
        %210 = sbr.rel (%p207) target = $region32
      $region31: #{tpu_custom_call.1} parent=5 // pred_region
        %s211 = ssub.s32 %s21, 1
        // Predicated region
        $region33: #{tpu_custom_call.1} parent=31 // pred_check
          %p212 = pneg %p54
        $region34: #{tpu_custom_call.1} parent=31 // pred_check_branch
          %214 = sbr.rel (%p212) target = $region36
        $region35: #{tpu_custom_call.1} parent=31 // pred_region
          %215 = dma.done [#allocation6], 512
        $region36: #{tpu_custom_call.1} parent=31 // pred_fallthru
          _
        // Predicated region
        $region37: #{tpu_custom_call.1} parent=31 // pred_check
          %p216 = pneg %p80
        $region38: #{tpu_custom_call.1} parent=31 // pred_check_branch
          %218 = sbr.rel (%p216) target = $region40
        $region39: #{tpu_custom_call.1} parent=31 // pred_region
          %219 = dma.done [#allocation9], 128
        $region40: #{tpu_custom_call.1} parent=31 // pred_fallthru
          _
        %p220 = pneg %p54
        %p221 = pneg %p51
        %p222 = pneg %p80
        %p223 = pneg %p77
        %p224 = pneg %p101
        %p225 = pneg %p98
        %p226 = pneg %p129
        %p227 = pneg %p126
        %s228 = sand.u32 %s116, 1
        %s229 = scalar_lea.sflag [#allocation7], %s228
        %s230 = sand.u32 %s116, 1
        %s231 = smul.addr %s230, 8
        %s232 = scalar_lea.vmem [#allocation10], %s231
        %p233 = pneg %p157
        %p234 = pneg %p154
        %s235 = smul.u32 4, %s31
        %p236 = scmp.lt.s32.totalorder %s30, 1
        %s237 = scalar_select %p236, %s30, 1
        %p238 = scmp.lt.s32.totalorder %s235, 3
        %s239 = scalar_select %p238, %s235, 3
        %s240 = smul.addr %s237, 4
        %s241 = sadd.s32 %s239, %s240
        %s242 = smul.addr %s241, 8
        %s243 = scalar_lea.vmem %s5, %s242
        %s244 = smul.u32 4, %s31
        %p245 = scmp.lt.s32.totalorder %s30, 1
        %s246 = scalar_select %p245, %s30, 1
        %p247 = scmp.lt.s32.totalorder %s244, 3
        %s248 = scalar_select %p247, %s244, 3
        %s249 = smul.addr %s246, 4
        %s250 = sadd.s32 %s248, %s249
        %s251 = smul.addr %s250, 8
        %s252 = scalar_lea.vmem %s5, %s251
        %s253 = smul.u32 4, %s31
        %s254 = smul.u32 %s31, 8
        %s255 = sadd.s32 %s254, 0
        %s256 = smul.u32 %s255, 4
        %s257 = sshra.s32 %s256, 7
        %s258 = sand.u32 %s256, 127
        %s259 = sadd.s32 %s257, %s30
        %s260 = smul.u32 %s259, 128
        %s261 = sshra.s32 %s256, 7
        %s262 = sand.u32 %s256, 127
        %s263 = sadd.s32 %s260, %s262
        %s264 = sld [smem:[#allocation4 + %s263]]
        %s265 = scalar_lea.vmem [#allocation5], %s264
        %v266 = vld [vmem:[%s265] sm:$0x1]
        %vm267 = vcmask 253952
        %268 = vst.msk [vmem:[#allocation2] sm:$0x1] %vm267, %v266
        %s269 = sadd.s32 %s256, 1
        %s270 = sshra.s32 %s269, 7
        %s271 = sand.u32 %s269, 127
        %s272 = sadd.s32 %s270, %s30
        %s273 = smul.u32 %s272, 128
        %s274 = sshra.s32 %s269, 7
        %s275 = sand.u32 %s269, 127
        %s276 = sadd.s32 %s273, %s275
        %s277 = sld [smem:[#allocation4 + %s276]]
        %s278 = scalar_lea.vmem [#allocation5], %s277
        %v279 = vld [vmem:[%s278] sm:$0x1]
        %281 = vrot.lane.b32.xlu0 %v279, 32
        %v282 = vpop.permute.xlu0 %281
        %vm284 = vcmask 516352
        %285 = vst.msk [vmem:[#allocation2] sm:$0x1] %vm284, %v282
        %s286 = sadd.s32 %s256, 2
        %s287 = sshra.s32 %s286, 7
        %s288 = sand.u32 %s286, 127
        %s289 = sadd.s32 %s287, %s30
        %s290 = smul.u32 %s289, 128
        %s291 = sshra.s32 %s286, 7
        %s292 = sand.u32 %s286, 127
        %s293 = sadd.s32 %s290, %s292
        %s294 = sld [smem:[#allocation4 + %s293]]
        %s295 = scalar_lea.vmem [#allocation5], %s294
        %v296 = vld [vmem:[%s295] sm:$0x1]
        %298 = vrot.lane.b32.xlu0 %v296, 64
        %v299 = vpop.permute.xlu0 %298
        %vm301 = vcmask 778752
        %302 = vst.msk [vmem:[#allocation2] sm:$0x1] %vm301, %v299
        %s303 = sadd.s32 %s256, 3
        %s304 = sshra.s32 %s303, 7
        %s305 = sand.u32 %s303, 127
        %s306 = sadd.s32 %s304, %s30
        %s307 = smul.u32 %s306, 128
        %s308 = sshra.s32 %s303, 7
        %s309 = sand.u32 %s303, 127
        %s310 = sadd.s32 %s307, %s309
        %s311 = sld [smem:[#allocation4 + %s310]]
        %s312 = scalar_lea.vmem [#allocation5], %s311
        %v313 = vld [vmem:[%s312] sm:$0x1]
        %315 = vrot.lane.b32.xlu0 %v313, 96
        %v316 = vpop.permute.xlu0 %315
        %vm318 = vcmask 1041152
        %319 = vst.msk [vmem:[#allocation2] sm:$0x1] %vm318, %v316
        %s320 = sadd.s32 %s255, 1
        %s321 = smul.u32 %s320, 4
        %s322 = sshra.s32 %s321, 7
        %s323 = sand.u32 %s321, 127
        %s324 = sadd.s32 %s322, %s30
        %s325 = smul.u32 %s324, 128
        %s326 = sshra.s32 %s321, 7
        %s327 = sand.u32 %s321, 127
        %s328 = sadd.s32 %s325, %s327
        %s329 = sld [smem:[#allocation4 + %s328]]
        %s330 = scalar_lea.vmem [#allocation5], %s329
        %v331 = vld [vmem:[%s330] sm:$0x1]
        %332 = vst.msk [vmem:[#allocation2 + $0x1] sm:$0x1] %vm267, %v331
        %s333 = sadd.s32 %s321, 1
        %s334 = sshra.s32 %s333, 7
        %s335 = sand.u32 %s333, 127
        %s336 = sadd.s32 %s334, %s30
        %s337 = smul.u32 %s336, 128
        %s338 = sshra.s32 %s333, 7
        %s339 = sand.u32 %s333, 127
        %s340 = sadd.s32 %s337, %s339
        %s341 = sld [smem:[#allocation4 + %s340]]
        %s342 = scalar_lea.vmem [#allocation5], %s341
        %v343 = vld [vmem:[%s342] sm:$0x1]
        %345 = vrot.lane.b32.xlu0 %v343, 32
        %v346 = vpop.permute.xlu0 %345
        %348 = vst.msk [vmem:[#allocation2 + $0x1] sm:$0x1] %vm284, %v346
        %s349 = sadd.s32 %s321, 2
        %s350 = sshra.s32 %s349, 7
        %s351 = sand.u32 %s349, 127
        %s352 = sadd.s32 %s350, %s30
        %s353 = smul.u32 %s352, 128
        %s354 = sshra.s32 %s349, 7
        %s355 = sand.u32 %s349, 127
        %s356 = sadd.s32 %s353, %s355
        %s357 = sld [smem:[#allocation4 + %s356]]
        %s358 = scalar_lea.vmem [#allocation5], %s357
        %v359 = vld [vmem:[%s358] sm:$0x1]
        %361 = vrot.lane.b32.xlu0 %v359, 64
        %v362 = vpop.permute.xlu0 %361
        %364 = vst.msk [vmem:[#allocation2 + $0x1] sm:$0x1] %vm301, %v362
        %s365 = sadd.s32 %s321, 3
        %s366 = sshra.s32 %s365, 7
        %s367 = sand.u32 %s365, 127
        %s368 = sadd.s32 %s366, %s30
        %s369 = smul.u32 %s368, 128
        %s370 = sshra.s32 %s365, 7
        %s371 = sand.u32 %s365, 127
        %s372 = sadd.s32 %s369, %s371
        %s373 = sld [smem:[#allocation4 + %s372]]
        %s374 = scalar_lea.vmem [#allocation5], %s373
        %v375 = vld [vmem:[%s374] sm:$0x1]
        %377 = vrot.lane.b32.xlu0 %v375, 96
        %v378 = vpop.permute.xlu0 %377
        %380 = vst.msk [vmem:[#allocation2 + $0x1] sm:$0x1] %vm318, %v378
        %s381 = sadd.s32 %s255, 2
        %s382 = smul.u32 %s381, 4
        %s383 = sshra.s32 %s382, 7
        %s384 = sand.u32 %s382, 127
        %s385 = sadd.s32 %s383, %s30
        %s386 = smul.u32 %s385, 128
        %s387 = sshra.s32 %s382, 7
        %s388 = sand.u32 %s382, 127
        %s389 = sadd.s32 %s386, %s388
        %s390 = sld [smem:[#allocation4 + %s389]]
        %s391 = scalar_lea.vmem [#allocation5], %s390
        %v392 = vld [vmem:[%s391] sm:$0x1]
        %393 = vst.msk [vmem:[#allocation2 + $0x2] sm:$0x1] %vm267, %v392
        %s394 = sadd.s32 %s382, 1
        %s395 = sshra.s32 %s394, 7
        %s396 = sand.u32 %s394, 127
        %s397 = sadd.s32 %s395, %s30
        %s398 = smul.u32 %s397, 128
        %s399 = sshra.s32 %s394, 7
        %s400 = sand.u32 %s394, 127
        %s401 = sadd.s32 %s398, %s400
        %s402 = sld [smem:[#allocation4 + %s401]]
        %s403 = scalar_lea.vmem [#allocation5], %s402
        %v404 = vld [vmem:[%s403] sm:$0x1]
        %406 = vrot.lane.b32.xlu0 %v404, 32
        %v407 = vpop.permute.xlu0 %406
        %409 = vst.msk [vmem:[#allocation2 + $0x2] sm:$0x1] %vm284, %v407
        %s410 = sadd.s32 %s382, 2
        %s411 = sshra.s32 %s410, 7
        %s412 = sand.u32 %s410, 127
        %s413 = sadd.s32 %s411, %s30
        %s414 = smul.u32 %s413, 128
        %s415 = sshra.s32 %s410, 7
        %s416 = sand.u32 %s410, 127
        %s417 = sadd.s32 %s414, %s416
        %s418 = sld [smem:[#allocation4 + %s417]]
        %s419 = scalar_lea.vmem [#allocation5], %s418
        %v420 = vld [vmem:[%s419] sm:$0x1]
        %422 = vrot.lane.b32.xlu0 %v420, 64
        %v423 = vpop.permute.xlu0 %422
        %425 = vst.msk [vmem:[#allocation2 + $0x2] sm:$0x1] %vm301, %v423
        %s426 = sadd.s32 %s382, 3
        %s427 = sshra.s32 %s426, 7
        %s428 = sand.u32 %s426, 127
        %s429 = sadd.s32 %s427, %s30
        %s430 = smul.u32 %s429, 128
        %s431 = sshra.s32 %s426, 7
        %s432 = sand.u32 %s426, 127
        %s433 = sadd.s32 %s430, %s432
        %s434 = sld [smem:[#allocation4 + %s433]]
        %s435 = scalar_lea.vmem [#allocation5], %s434
        %v436 = vld [vmem:[%s435] sm:$0x1]
        %438 = vrot.lane.b32.xlu0 %v436, 96
        %v439 = vpop.permute.xlu0 %438
        %441 = vst.msk [vmem:[#allocation2 + $0x2] sm:$0x1] %vm318, %v439
        %s442 = sadd.s32 %s255, 3
        %s443 = smul.u32 %s442, 4
        %s444 = sshra.s32 %s443, 7
        %s445 = sand.u32 %s443, 127
        %s446 = sadd.s32 %s444, %s30
        %s447 = smul.u32 %s446, 128
        %s448 = sshra.s32 %s443, 7
        %s449 = sand.u32 %s443, 127
        %s450 = sadd.s32 %s447, %s449
        %s451 = sld [smem:[#allocation4 + %s450]]
        %s452 = scalar_lea.vmem [#allocation5], %s451
        %v453 = vld [vmem:[%s452] sm:$0x1]
        %454 = vst.msk [vmem:[#allocation2 + $0x3] sm:$0x1] %vm267, %v453
        %s455 = sadd.s32 %s443, 1
        %s456 = sshra.s32 %s455, 7
        %s457 = sand.u32 %s455, 127
        %s458 = sadd.s32 %s456, %s30
        %s459 = smul.u32 %s458, 128
        %s460 = sshra.s32 %s455, 7
        %s461 = sand.u32 %s455, 127
        %s462 = sadd.s32 %s459, %s461
        %s463 = sld [smem:[#allocation4 + %s462]]
        %s464 = scalar_lea.vmem [#allocation5], %s463
        %v465 = vld [vmem:[%s464] sm:$0x1]
        %467 = vrot.lane.b32.xlu0 %v465, 32
        %v468 = vpop.permute.xlu0 %467
        %470 = vst.msk [vmem:[#allocation2 + $0x3] sm:$0x1] %vm284, %v468
        %s471 = sadd.s32 %s443, 2
        %s472 = sshra.s32 %s471, 7
        %s473 = sand.u32 %s471, 127
        %s474 = sadd.s32 %s472, %s30
        %s475 = smul.u32 %s474, 128
        %s476 = sshra.s32 %s471, 7
        %s477 = sand.u32 %s471, 127
        %s478 = sadd.s32 %s475, %s477
        %s479 = sld [smem:[#allocation4 + %s478]]
        %s480 = scalar_lea.vmem [#allocation5], %s479
        %v481 = vld [vmem:[%s480] sm:$0x1]
        %483 = vrot.lane.b32.xlu0 %v481, 64
        %v484 = vpop.permute.xlu0 %483
        %486 = vst.msk [vmem:[#allocation2 + $0x3] sm:$0x1] %vm301, %v484
        %s487 = sadd.s32 %s443, 3
        %s488 = sshra.s32 %s487, 7
        %s489 = sand.u32 %s487, 127
        %s490 = sadd.s32 %s488, %s30
        %s491 = smul.u32 %s490, 128
        %s492 = sshra.s32 %s487, 7
        %s493 = sand.u32 %s487, 127
        %s494 = sadd.s32 %s491, %s493
        %s495 = sld [smem:[#allocation4 + %s494]]
        %s496 = scalar_lea.vmem [#allocation5], %s495
        %v497 = vld [vmem:[%s496] sm:$0x1]
        %499 = vrot.lane.b32.xlu0 %v497, 96
        %v500 = vpop.permute.xlu0 %499
        %502 = vst.msk [vmem:[#allocation2 + $0x3] sm:$0x1] %vm318, %v500
        %s503 = sadd.s32 %s255, 4
        %s504 = smul.u32 %s503, 4
        %s505 = sshra.s32 %s504, 7
        %s506 = sand.u32 %s504, 127
        %s507 = sadd.s32 %s505, %s30
        %s508 = smul.u32 %s507, 128
        %s509 = sshra.s32 %s504, 7
        %s510 = sand.u32 %s504, 127
        %s511 = sadd.s32 %s508, %s510
        %s512 = sld [smem:[#allocation4 + %s511]]
        %s513 = scalar_lea.vmem [#allocation5], %s512
        %v514 = vld [vmem:[%s513] sm:$0x1]
        %515 = vst.msk [vmem:[#allocation2 + $0x4] sm:$0x1] %vm267, %v514
        %s516 = sadd.s32 %s504, 1
        %s517 = sshra.s32 %s516, 7
        %s518 = sand.u32 %s516, 127
        %s519 = sadd.s32 %s517, %s30
        %s520 = smul.u32 %s519, 128
        %s521 = sshra.s32 %s516, 7
        %s522 = sand.u32 %s516, 127
        %s523 = sadd.s32 %s520, %s522
        %s524 = sld [smem:[#allocation4 + %s523]]
        %s525 = scalar_lea.vmem [#allocation5], %s524
        %v526 = vld [vmem:[%s525] sm:$0x1]
        %528 = vrot.lane.b32.xlu0 %v526, 32
        %v529 = vpop.permute.xlu0 %528
        %531 = vst.msk [vmem:[#allocation2 + $0x4] sm:$0x1] %vm284, %v529
        %s532 = sadd.s32 %s504, 2
        %s533 = sshra.s32 %s532, 7
        %s534 = sand.u32 %s532, 127
        %s535 = sadd.s32 %s533, %s30
        %s536 = smul.u32 %s535, 128
        %s537 = sshra.s32 %s532, 7
        %s538 = sand.u32 %s532, 127
        %s539 = sadd.s32 %s536, %s538
        %s540 = sld [smem:[#allocation4 + %s539]]
        %s541 = scalar_lea.vmem [#allocation5], %s540
        %v542 = vld [vmem:[%s541] sm:$0x1]
        %544 = vrot.lane.b32.xlu0 %v542, 64
        %v545 = vpop.permute.xlu0 %544
        %547 = vst.msk [vmem:[#allocation2 + $0x4] sm:$0x1] %vm301, %v545
        %s548 = sadd.s32 %s504, 3
        %s549 = sshra.s32 %s548, 7
        %s550 = sand.u32 %s548, 127
        %s551 = sadd.s32 %s549, %s30
        %s552 = smul.u32 %s551, 128
        %s553 = sshra.s32 %s548, 7
        %s554 = sand.u32 %s548, 127
        %s555 = sadd.s32 %s552, %s554
        %s556 = sld [smem:[#allocation4 + %s555]]
        %s557 = scalar_lea.vmem [#allocation5], %s556
        %v558 = vld [vmem:[%s557] sm:$0x1]
        %560 = vrot.lane.b32.xlu0 %v558, 96
        %v561 = vpop.permute.xlu0 %560
        %563 = vst.msk [vmem:[#allocation2 + $0x4] sm:$0x1] %vm318, %v561
        %s564 = sadd.s32 %s255, 5
        %s565 = smul.u32 %s564, 4
        %s566 = sshra.s32 %s565, 7
        %s567 = sand.u32 %s565, 127
        %s568 = sadd.s32 %s566, %s30
        %s569 = smul.u32 %s568, 128
        %s570 = sshra.s32 %s565, 7
        %s571 = sand.u32 %s565, 127
        %s572 = sadd.s32 %s569, %s571
        %s573 = sld [smem:[#allocation4 + %s572]]
        %s574 = scalar_lea.vmem [#allocation5], %s573
        %v575 = vld [vmem:[%s574] sm:$0x1]
        %576 = vst.msk [vmem:[#allocation2 + $0x5] sm:$0x1] %vm267, %v575
        %s577 = sadd.s32 %s565, 1
        %s578 = sshra.s32 %s577, 7
        %s579 = sand.u32 %s577, 127
        %s580 = sadd.s32 %s578, %s30
        %s581 = smul.u32 %s580, 128
        %s582 = sshra.s32 %s577, 7
        %s583 = sand.u32 %s577, 127
        %s584 = sadd.s32 %s581, %s583
        %s585 = sld [smem:[#allocation4 + %s584]]
        %s586 = scalar_lea.vmem [#allocation5], %s585
        %v587 = vld [vmem:[%s586] sm:$0x1]
        %589 = vrot.lane.b32.xlu0 %v587, 32
        %v590 = vpop.permute.xlu0 %589
        %592 = vst.msk [vmem:[#allocation2 + $0x5] sm:$0x1] %vm284, %v590
        %s593 = sadd.s32 %s565, 2
        %s594 = sshra.s32 %s593, 7
        %s595 = sand.u32 %s593, 127
        %s596 = sadd.s32 %s594, %s30
        %s597 = smul.u32 %s596, 128
        %s598 = sshra.s32 %s593, 7
        %s599 = sand.u32 %s593, 127
        %s600 = sadd.s32 %s597, %s599
        %s601 = sld [smem:[#allocation4 + %s600]]
        %s602 = scalar_lea.vmem [#allocation5], %s601
        %v603 = vld [vmem:[%s602] sm:$0x1]
        %605 = vrot.lane.b32.xlu0 %v603, 64
        %v606 = vpop.permute.xlu0 %605
        %608 = vst.msk [vmem:[#allocation2 + $0x5] sm:$0x1] %vm301, %v606
        %s609 = sadd.s32 %s565, 3
        %s610 = sshra.s32 %s609, 7
        %s611 = sand.u32 %s609, 127
        %s612 = sadd.s32 %s610, %s30
        %s613 = smul.u32 %s612, 128
        %s614 = sshra.s32 %s609, 7
        %s615 = sand.u32 %s609, 127
        %s616 = sadd.s32 %s613, %s615
        %s617 = sld [smem:[#allocation4 + %s616]]
        %s618 = scalar_lea.vmem [#allocation5], %s617
        %v619 = vld [vmem:[%s618] sm:$0x1]
        %621 = vrot.lane.b32.xlu0 %v619, 96
        %v622 = vpop.permute.xlu0 %621
        %624 = vst.msk [vmem:[#allocation2 + $0x5] sm:$0x1] %vm318, %v622
        %s625 = sadd.s32 %s255, 6
        %s626 = smul.u32 %s625, 4
        %s627 = sshra.s32 %s626, 7
        %s628 = sand.u32 %s626, 127
        %s629 = sadd.s32 %s627, %s30
        %s630 = smul.u32 %s629, 128
        %s631 = sshra.s32 %s626, 7
        %s632 = sand.u32 %s626, 127
        %s633 = sadd.s32 %s630, %s632
        %s634 = sld [smem:[#allocation4 + %s633]]
        %s635 = scalar_lea.vmem [#allocation5], %s634
        %v636 = vld [vmem:[%s635] sm:$0x1]
        %637 = vst.msk [vmem:[#allocation2 + $0x6] sm:$0x1] %vm267, %v636
        %s638 = sadd.s32 %s626, 1
        %s639 = sshra.s32 %s638, 7
        %s640 = sand.u32 %s638, 127
        %s641 = sadd.s32 %s639, %s30
        %s642 = smul.u32 %s641, 128
        %s643 = sshra.s32 %s638, 7
        %s644 = sand.u32 %s638, 127
        %s645 = sadd.s32 %s642, %s644
        %s646 = sld [smem:[#allocation4 + %s645]]
        %s647 = scalar_lea.vmem [#allocation5], %s646
        %v648 = vld [vmem:[%s647] sm:$0x1]
        %650 = vrot.lane.b32.xlu0 %v648, 32
        %v651 = vpop.permute.xlu0 %650
        %653 = vst.msk [vmem:[#allocation2 + $0x6] sm:$0x1] %vm284, %v651
        %s654 = sadd.s32 %s626, 2
        %s655 = sshra.s32 %s654, 7
        %s656 = sand.u32 %s654, 127
        %s657 = sadd.s32 %s655, %s30
        %s658 = smul.u32 %s657, 128
        %s659 = sshra.s32 %s654, 7
        %s660 = sand.u32 %s654, 127
        %s661 = sadd.s32 %s658, %s660
        %s662 = sld [smem:[#allocation4 + %s661]]
        %s663 = scalar_lea.vmem [#allocation5], %s662
        %v664 = vld [vmem:[%s663] sm:$0x1]
        %666 = vrot.lane.b32.xlu0 %v664, 64
        %v667 = vpop.permute.xlu0 %666
        %669 = vst.msk [vmem:[#allocation2 + $0x6] sm:$0x1] %vm301, %v667
        %s670 = sadd.s32 %s626, 3
        %s671 = sshra.s32 %s670, 7
        %s672 = sand.u32 %s670, 127
        %s673 = sadd.s32 %s671, %s30
        %s674 = smul.u32 %s673, 128
        %s675 = sshra.s32 %s670, 7
        %s676 = sand.u32 %s670, 127
        %s677 = sadd.s32 %s674, %s676
        %s678 = sld [smem:[#allocation4 + %s677]]
        %s679 = scalar_lea.vmem [#allocation5], %s678
        %v680 = vld [vmem:[%s679] sm:$0x1]
        %682 = vrot.lane.b32.xlu0 %v680, 96
        %v683 = vpop.permute.xlu0 %682
        %685 = vst.msk [vmem:[#allocation2 + $0x6] sm:$0x1] %vm318, %v683
        %s686 = sadd.s32 %s255, 7
        %s687 = smul.u32 %s686, 4
        %s688 = sshra.s32 %s687, 7
        %s689 = sand.u32 %s687, 127
        %s690 = sadd.s32 %s688, %s30
        %s691 = smul.u32 %s690, 128
        %s692 = sshra.s32 %s687, 7
        %s693 = sand.u32 %s687, 127
        %s694 = sadd.s32 %s691, %s693
        %s695 = sld [smem:[#allocation4 + %s694]]
        %s696 = scalar_lea.vmem [#allocation5], %s695
        %v697 = vld [vmem:[%s696] sm:$0x1]
        %698 = vst.msk [vmem:[#allocation2 + $0x7] sm:$0x1] %vm267, %v697
        %s699 = sadd.s32 %s687, 1
        %s700 = sshra.s32 %s699, 7
        %s701 = sand.u32 %s699, 127
        %s702 = sadd.s32 %s700, %s30
        %s703 = smul.u32 %s702, 128
        %s704 = sshra.s32 %s699, 7
        %s705 = sand.u32 %s699, 127
        %s706 = sadd.s32 %s703, %s705
        %s707 = sld [smem:[#allocation4 + %s706]]
        %s708 = scalar_lea.vmem [#allocation5], %s707
        %v709 = vld [vmem:[%s708] sm:$0x1]
        %711 = vrot.lane.b32.xlu0 %v709, 32
        %v712 = vpop.permute.xlu0 %711
        %714 = vst.msk [vmem:[#allocation2 + $0x7] sm:$0x1] %vm284, %v712
        %s715 = sadd.s32 %s687, 2
        %s716 = sshra.s32 %s715, 7
        %s717 = sand.u32 %s715, 127
        %s718 = sadd.s32 %s716, %s30
        %s719 = smul.u32 %s718, 128
        %s720 = sshra.s32 %s715, 7
        %s721 = sand.u32 %s715, 127
        %s722 = sadd.s32 %s719, %s721
        %s723 = sld [smem:[#allocation4 + %s722]]
        %s724 = scalar_lea.vmem [#allocation5], %s723
        %v725 = vld [vmem:[%s724] sm:$0x1]
        %727 = vrot.lane.b32.xlu0 %v725, 64
        %v728 = vpop.permute.xlu0 %727
        %730 = vst.msk [vmem:[#allocation2 + $0x7] sm:$0x1] %vm301, %v728
        %s731 = sadd.s32 %s687, 3
        %s732 = sshra.s32 %s731, 7
        %s733 = sand.u32 %s731, 127
        %s734 = sadd.s32 %s732, %s30
        %s735 = smul.u32 %s734, 128
        %s736 = sshra.s32 %s731, 7
        %s737 = sand.u32 %s731, 127
        %s738 = sadd.s32 %s735, %s737
        %s739 = sld [smem:[#allocation4 + %s738]]
        %s740 = scalar_lea.vmem [#allocation5], %s739
        %v741 = vld [vmem:[%s740] sm:$0x1]
        %743 = vrot.lane.b32.xlu0 %v741, 96
        %v744 = vpop.permute.xlu0 %743
        %746 = vst.msk [vmem:[#allocation2 + $0x7] sm:$0x1] %vm318, %v744
        %v747 = vld [vmem:[#allocation2] sm:$0xff]
        %v748 = vld [vmem:[#allocation8] sm:$0xff]
        %v749 = vadd.f32 %v747, %v748
        %750 = vst [vmem:[%s232] sm:$0xff] %v749
        %s751 = smul.u32 %s31, 32
        %v752 = vlaneseq
        %v753 = vshrl.u32 %v752, 7
        %v754 = vadd.s32 %v753, 8
        %v755 = vadd.s32 %v753, 16
        %v756 = vadd.s32 %v753, 24
        %v757 = vstv %s751
        %v758 = vadd.s32 %v757, %v753
        %v759 = vadd.s32 %v757, %v754
        %v760 = vadd.s32 %v757, %v755
        %v761 = vadd.s32 %v757, %v756
        %v762 = vcvt.s32.f32 %v758
        %v763 = vcvt.s32.f32 %v759
        %v764 = vcvt.s32.f32 %v760
        %v765 = vcvt.s32.f32 %v761
        %v766 = vld [vmem:[%s3] sm:$0x1]
        %v768 = vlaneseq
        %v769 = vshrl.u32 %v768, 7
        %v770 = vsub.s32 0, %v769
        %v771 = vrot.slane %v766, %v770
        %v773 = vmul.f32 %v762, %v771
        %v774 = vmul.f32 %v763, %v771
        %v775 = vmul.f32 %v764, %v771
        %v776 = vmul.f32 %v765, %v771
        %vm777 = vcmask 130048
        %778 = vst.msk [vmem:[%s252] sm:$0xff] %vm777, %v773
        %779 = vst.msk [vmem:[%s252 + $0x8] sm:$0xff] %vm777, %v774
        %780 = vst.msk [vmem:[%s252 + $0x10] sm:$0xff] %vm777, %v775
        %781 = vst.msk [vmem:[%s252 + $0x18] sm:$0xff] %vm777, %v776
        %s782 = sand.u32 %s116, 1
        %s783 = scalar_lea.sflag [#allocation7], %s782
        %s784 = sand.u32 %s116, 1
        %s785 = smul.addr %s784, 8
        %s786 = scalar_lea.vmem [#allocation10], %s785
        %s787 = smul.u32 4, %s31
        %p788 = scmp.lt.s32.totalorder %s30, 1
        %s789 = scalar_select %p788, %s30, 1
        %p790 = scmp.lt.s32.totalorder %s787, 3
        %s791 = scalar_select %p790, %s787, 3
        %s792 = smul.addr %s789, 4
        %s793 = sadd.s32 %s791, %s792
        %s794 = smul.addr %s793, 8
        %s795 = scalar_lea.vmem %s5, %s794
        // Predicated region
        $region41: #{tpu_custom_call.1} parent=31 // pred_check
          %p796 = pneg %p126
        $region42: #{tpu_custom_call.1} parent=31 // pred_check_branch
          %798 = sbr.rel (%p796) target = $region44
        $region43: #{tpu_custom_call.1} parent=31 // pred_region
          %s800 = ssub.s32 128, 128
          %801 = vsyncadd %s783, %s800
          %s802 = sadd.s32 %s31, %s30
          %s803 = smul.addr %s802, 128
          %s804 = scalar_lea.hbm %s4, %s803
          %s806 = sshll.u32 %s786, 4
          %s807 = int_to_ptr.vmem [resolvable:$true] %s806
          %809 = dma.vmem_to_hbm [thread:$0]  %s807, 128, %s804, %s783
        $region44: #{tpu_custom_call.1} parent=31 // pred_fallthru
          _
        // Predicated region
        $region45: #{tpu_custom_call.1} parent=31 // pred_check
          %p810 = pneg %p154
        $region46: #{tpu_custom_call.1} parent=31 // pred_check_branch
          %812 = sbr.rel (%p810) target = $region48
        $region47: #{tpu_custom_call.1} parent=31 // pred_region
          %s813 = smul.u32 4, %s31
        $region48: #{tpu_custom_call.1} parent=31 // pred_fallthru
          _
      $region32: #{tpu_custom_call.1} parent=5 // pred_fallthru
        _
      %p814 = scmp.le.s32.totalorder 2, %s21
      // Predicated region
      $region49: #{tpu_custom_call.1} parent=5 // pred_check
        %p815 = pneg %p814
      $region50: #{tpu_custom_call.1} parent=5 // pred_check_branch
        %817 = sbr.rel (%p815) target = $region52
      $region51: #{tpu_custom_call.1} parent=5 // pred_region
        %s818 = ssub.s32 %s21, 2
        // Predicated region
        $region53: #{tpu_custom_call.1} parent=51 // pred_check
          %p819 = pneg %p132
        $region54: #{tpu_custom_call.1} parent=51 // pred_check_branch
          %821 = sbr.rel (%p819) target = $region56
        $region55: #{tpu_custom_call.1} parent=51 // pred_region
          %s822 = sand.u32 %s117, 1
          %s823 = scalar_lea.sflag [#allocation7], %s822
          %s824 = sand.u32 %s117, 1
          %s825 = smul.addr %s824, 8
          %s826 = scalar_lea.vmem [#allocation10], %s825
          %827 = dma.done %s823, 128
        $region56: #{tpu_custom_call.1} parent=51 // pred_fallthru
          _
        // Predicated region
        $region57: #{tpu_custom_call.1} parent=51 // pred_check
          %p828 = pneg %p160
        $region58: #{tpu_custom_call.1} parent=51 // pred_check_branch
          %830 = sbr.rel (%p828) target = $region60
        $region59: #{tpu_custom_call.1} parent=51 // pred_region
          %s831 = smul.u32 4, %s33
          %p832 = scmp.lt.s32.totalorder %s32, 1
          %s833 = scalar_select %p832, %s32, 1
          %p834 = scmp.lt.s32.totalorder %s831, 3
          %s835 = scalar_select %p834, %s831, 3
          %s836 = smul.addr %s833, 4
          %s837 = sadd.s32 %s835, %s836
          %s838 = smul.addr %s837, 8
          %s839 = scalar_lea.vmem %s5, %s838
        $region60: #{tpu_custom_call.1} parent=51 // pred_fallthru
          _
      $region52: #{tpu_custom_call.1} parent=5 // pred_fallthru
        _
    $region6: #{tpu_custom_call.1} parent=1 // loop_footer
      %s25 = sadd.s32 1, %s21
    $region7: #{tpu_custom_call.1} parent=1 // loop_footer_branch
      %20 = sbr.rel target = $region3
    $region8: #{tpu_custom_call.1} parent=1 // loop_exit
      _
    %840 = vsyncpa [#allocation6], 1
    %s841 = scalar_lea.sflag [#allocation6], 1
    %842 = vsyncpa %s841, 1
    %843 = vsyncpa [#allocation9], 1
    %844 = vsyncpa [#allocation7], 1
    %s845 = scalar_lea.sflag [#allocation7], 1
    %846 = vsyncpa %s845, 1

</llo_original>
